<compile_context>
chip_gen: v7x
topology: tpu7x:2x2x1
jax: 0.10.0
libtpu: 0.0.40
codegen_flags: <defaults>
</compile_context>

<pallas_src>
import functools

import jax
import jax.numpy as jnp
from jax.experimental import pallas as pl
from jax.experimental.pallas import tpu as pltpu

BN_EPS = 1e-5
NEG_BIG = -1e30

NUM_RESIDENT = 20   # BN gamma/beta vectors, DxD weights, head weights/biases
NUM_OUTPUTS = 8


# ------------------------------- small utils --------------------------------
def _round_up(x, m):
    return (x + m - 1) // m * m


def _pad2(a, rows, cols, val=0.0):
    pr, pc = rows - a.shape[0], cols - a.shape[1]
    if pr == 0 and pc == 0:
        return a
    return jnp.pad(a, ((0, pr), (0, pc)), constant_values=val)


def _nbytes(a):
    return a.size * a.dtype.itemsize


def _vmem_budget_bytes():
    """Per-generation VMEM budget with headroom for compiler internal scratch."""
    try:
        cap = pltpu.get_tpu_info().vmem_capacity_bytes
    except Exception:
        cap = 64 * 2 ** 20          # conservative fallback (v7x-sized)
    return int(cap * 7 // 8)        # ~56 MiB on v7x, ~112 MiB on v5e/v6e


# ------------------------------ shared epilogue -------------------------------
def _epilogue(num_classes, hs, ht, p, outs):
    """BN/ReLU chain + heads + masked softmax; hs/ht are pre-BN f32 [B, Dp]."""
    (gb_s, eb_s, wc_s, gc_s, ec_s,
     w1_s, g1_s, e1_s, w2_s, g2_s, e2_s,
     gb_t, eb_t, wc_t, gc_t, ec_t,
     whs, bhs, wht, bht) = p
    (logits_s_ref, logits_t_ref, sm_s_ref, sm_t_ref,
     fcb_s_ref, fcc_s_ref, fcb_t_ref, fcc_t_ref) = outs

    def bn_relu(h, g_ref, e_ref):
        # BatchNorm1d, training mode (batch stats, biased variance).
        # Note: the pre-BN linear bias is omitted on purpose — it is exactly
        # cancelled by the batch-mean subtraction.
        mean = jnp.mean(h, axis=0, keepdims=True)
        var = jnp.mean((h - mean) * (h - mean), axis=0, keepdims=True)
        scale = g_ref[...] * jax.lax.rsqrt(var + BN_EPS)
        shift = e_ref[...] - mean * scale
        return jnp.maximum(h * scale + shift, 0.0)

    def lin_bn_relu(x_f32, w_ref, g_ref, e_ref):
        h = jnp.dot(x_f32.astype(jnp.bfloat16), w_ref[...],
                    preferred_element_type=jnp.float32)
        return bn_relu(h, g_ref, e_ref)

    fcb_s = bn_relu(hs, gb_s, eb_s)
    fcb_t = bn_relu(ht, gb_t, eb_t)
    fcc_s = lin_bn_relu(fcb_s, wc_s, gc_s, ec_s)
    fcc_t = lin_bn_relu(fcb_t, wc_t, gc_t, ec_t)
    fc1_s = lin_bn_relu(fcc_s, w1_s, g1_s, e1_s)
    fc2_s = lin_bn_relu(fc1_s, w2_s, g2_s, e2_s)

    fc2_s_t = fc2_s + fcc_t
    logits_s = jnp.dot(fc2_s_t.astype(jnp.bfloat16), whs[...],
                       preferred_element_type=jnp.float32) + bhs[...]
    logits_t = jnp.dot(fcc_t.astype(jnp.bfloat16), wht[...],
                       preferred_element_type=jnp.float32) + bht[...]

    # Softmax over valid class columns only (class dim is lane-padded).
    col = jax.lax.broadcasted_iota(jnp.int32, logits_s.shape, 1)
    valid = col < num_classes

    def softmax_rows(z):
        zm = jnp.where(valid, z, NEG_BIG)
        zm = zm - jnp.max(zm, axis=1, keepdims=True)
        ez = jnp.where(valid, jnp.exp(zm), 0.0)
        denom = jnp.sum(ez, axis=1, keepdims=True)
        return ez * pl.reciprocal(denom, approx=True)

    logits_s_ref[...] = logits_s
    logits_t_ref[...] = logits_t
    sm_s_ref[...] = softmax_rows(logits_s)
    sm_t_ref[...] = softmax_rows(logits_t)
    fcb_s_ref[...] = fcb_s
    fcc_s_ref[...] = fcc_s
    fcb_t_ref[...] = fcb_t
    fcc_t_ref[...] = fcc_t


# --------------------------------- kernels -----------------------------------
def rtn_kernel_single(num_classes, fs_ref, ft_ref, wbs_ref, wbt_ref, *rest):
    """Single grid step: whole (padded) feature dim resident in VMEM."""
    p = rest[:NUM_RESIDENT]
    outs = rest[NUM_RESIDENT:NUM_RESIDENT + NUM_OUTPUTS]
    hs = jnp.dot(fs_ref[...], wbs_ref[...], preferred_element_type=jnp.float32)
    ht = jnp.dot(ft_ref[...], wbt_ref[...], preferred_element_type=jnp.float32)
    _epilogue(num_classes, hs, ht, p, outs)


def rtn_kernel_ktiled(num_classes, fs_ref, ft_ref, wbs_ref, wbt_ref, *rest):
    """Fallback: K-tiled first-layer matmuls with f32 VMEM accumulators."""
    p = rest[:NUM_RESIDENT]
    outs = rest[NUM_RESIDENT:NUM_RESIDENT + NUM_OUTPUTS]
    acc_s, acc_t = rest[NUM_RESIDENT + NUM_OUTPUTS:NUM_RESIDENT + NUM_OUTPUTS + 2]

    k = pl.program_id(0)

    @pl.when(k == 0)
    def _():
        acc_s[...] = jnp.zeros_like(acc_s)
        acc_t[...] = jnp.zeros_like(acc_t)

    acc_s[...] += jnp.dot(fs_ref[...], wbs_ref[...],
                          preferred_element_type=jnp.float32)
    acc_t[...] += jnp.dot(ft_ref[...], wbt_ref[...],
                          preferred_element_type=jnp.float32)

    @pl.when(k == pl.num_programs(0) - 1)
    def _():
        _epilogue(num_classes, acc_s[...], acc_t[...], p, outs)


# ---------------------------- one-time param prep -----------------------------
def pack_params(params):
    """One-time packing: pad to lane-dense shapes and cast weights to bf16.

    Call once per model (outside the per-step forward); the packed pytree is
    passed directly to `rtn_forward`, eliminating per-call HBM repacking."""
    F, D = params["wb_s"].shape
    C = params["whs"].shape[1]
    Fp, Dp, Cp = _round_up(F, 128), _round_up(D, 128), _round_up(C, 128)
    f32, bf16 = jnp.float32, jnp.bfloat16

    def w(name, rows, cols):
        return _pad2(params[name], rows, cols).astype(bf16)

    def v(name, cols, val=0.0):
        return _pad2(params[name], 1, cols, val).astype(f32)

    # Pre-BN linear biases (bb_*, bc_*, b1_s, b2_s) are intentionally NOT packed
    # (cancelled by training-mode BN mean subtraction).
    resident = [
        v("gb_s", Dp, 1.0), v("eb_s", Dp),
        w("wc_s", Dp, Dp), v("gc_s", Dp, 1.0), v("ec_s", Dp),
        w("w1_s", Dp, Dp), v("g1_s", Dp, 1.0), v("e1_s", Dp),
        w("w2_s", Dp, Dp), v("g2_s", Dp, 1.0), v("e2_s", Dp),
        v("gb_t", Dp, 1.0), v("eb_t", Dp),
        w("wc_t", Dp, Dp), v("gc_t", Dp, 1.0), v("ec_t", Dp),
        w("whs", Dp, Cp), v("bhs", Cp), w("wht", Dp, Cp), v("bht", Cp),
    ]
    assert len(resident) == NUM_RESIDENT
    return {
        "dims": (F, D, C, Fp, Dp, Cp),
        "wb_s": w("wb_s", Fp, Dp),
        "wb_t": w("wb_t", Fp, Dp),
        "resident": resident,
    }


# --------------------------------- wrapper -----------------------------------
def rtn_forward(feat_s, feat_t, packed, *, tk=None):
    """Returns the 8-tuple of the PyTorch forward:
       (logits_s, logits_t, softmax_s, softmax_t, fcb_s, fcc_s, fcb_t, fcc_t)."""
    F, D, C, Fp, Dp, Cp = packed["dims"]
    B = feat_s.shape[0]
    assert feat_s.shape == (B, F) and feat_t.shape == (B, F)
    f32, bf16 = jnp.float32, jnp.bfloat16

    # Per-call work: only pad + cast the feature matrices (weights are packed).
    feat_s_p = _pad2(feat_s.astype(f32), B, Fp).astype(bf16)
    feat_t_p = _pad2(feat_t.astype(f32), B, Fp).astype(bf16)

    resident = packed["resident"]
    resident_bytes = sum(_nbytes(a) for a in resident)

    out_shape = (
        jax.ShapeDtypeStruct((B, Cp), f32),   # logits_s (padded)
        jax.ShapeDtypeStruct((B, Cp), f32),   # logits_t
        jax.ShapeDtypeStruct((B, Cp), f32),   # softmax_s
        jax.ShapeDtypeStruct((B, Cp), f32),   # softmax_t
        jax.ShapeDtypeStruct((B, Dp), f32),   # fcb_s
        jax.ShapeDtypeStruct((B, Dp), f32),   # fcc_s
        jax.ShapeDtypeStruct((B, Dp), f32),   # fcb_t
        jax.ShapeDtypeStruct((B, Dp), f32),   # fcc_t
    )
    out_bytes = sum(s.size * 4 for s in out_shape)

    budget = _vmem_budget_bytes()

    def footprint(tile_k, single):
        # Conservative: assume double-buffering for all blocks; + 8 MiB headroom.
        streamed = 2 * (B * tile_k * 2) + 2 * (tile_k * Dp * 2)   # bf16 tiles
        scratch = 0 if single else 2 * B * Dp * 4
        return 2 * (streamed + resident_bytes + out_bytes) + scratch + (8 << 20)

    # ---- path / tile selection ----
    if tk is None:
        if footprint(Fp, True) <= budget:
            tk = Fp                                   # single-shot, no K grid
        else:
            tk = 128
            for cand in (1024, 512, 256):             # largest tile that fits
                if Fp % cand == 0 and footprint(cand, False) <= budget:
                    tk = cand
                    break
    else:
        assert tk % 128 == 0 and Fp % tk == 0, "tk must divide padded feature dim"

    use_single = (tk == Fp)
    nk = Fp // tk

    # ---- block specs ----
    in_specs = [
        pl.BlockSpec((B, tk), lambda k: (0, k)),    # feat_s (streamed over K)
        pl.BlockSpec((B, tk), lambda k: (0, k)),    # feat_t
        pl.BlockSpec((tk, Dp), lambda k: (k, 0)),   # wb_s   (streamed over K)
        pl.BlockSpec((tk, Dp), lambda k: (k, 0)),   # wb_t
    ] + [pl.BlockSpec(a.shape, lambda k: (0, 0)) for a in resident]
    out_specs = [pl.BlockSpec(s.shape, lambda k: (0, 0)) for s in out_shape]

    scratch_shapes = [] if use_single else [pltpu.VMEM((B, Dp), f32),
                                            pltpu.VMEM((B, Dp), f32)]
    kernel = rtn_kernel_single if use_single else rtn_kernel_ktiled

    vmem_limit = int(min(budget, max(16 * 2 ** 20, footprint(tk, use_single))))

    cost = pl.CostEstimate(
        flops=2 * B * (2 * Fp * Dp + 4 * Dp * Dp + 2 * Dp * Cp),
        transcendentals=2 * B * Cp,
        bytes_accessed=(2 * B * Fp * 2 + 2 * Fp * Dp * 2
                        + resident_bytes + out_bytes),
    )

    outs = pl.pallas_call(
        functools.partial(kernel, C),
        out_shape=out_shape,
        grid_spec=pltpu.PrefetchScalarGridSpec(
            num_scalar_prefetch=0,
            grid=(nk,),
            in_specs=in_specs,
            out_specs=out_specs,
            scratch_shapes=scratch_shapes,
        ),
        compiler_params=pltpu.CompilerParams(
            dimension_semantics=("arbitrary",),   # K reduction axis (or trivial)
            vmem_limit_bytes=vmem_limit,
        ),
        cost_estimate=cost,
    )(feat_s_p, feat_t_p, packed["wb_s"], packed["wb_t"], *resident)

    logits_s, logits_t, sm_s, sm_t, fcb_s, fcc_s, fcb_t, fcc_t = outs
    return (logits_s[:, :C], logits_t[:, :C], sm_s[:, :C], sm_t[:, :C],
            fcb_s[:, :D], fcc_s[:, :D], fcb_t[:, :D], fcc_t[:, :D])


# ----------------------------- parameter setup -------------------------------
def init_params(key, feature_dim, bottleneck_dim, class_num):
    """Mirrors the PyTorch __init__:
       bottleneck Linear weights ~ N(0, 0.005), bias = 0.1
       head Linear weights      ~ N(0, 0.01),  bias = 0.0
       BatchNorm1d: gamma = 1, beta = 0."""
    keys = jax.random.split(key, 8)
    f32 = jnp.float32

    def lin(k, fan_in, fan_out, std, bias_val):
        wt = (std * jax.random.normal(k, (fan_in, fan_out))).astype(f32)
        b = jnp.full((1, fan_out), bias_val, dtype=f32)
        return wt, b

    def bn(dim):
        return jnp.ones((1, dim), f32), jnp.zeros((1, dim), f32)

    p = {}
    p["wb_s"], p["bb_s"] = lin(keys[0], feature_dim, bottleneck_dim, 0.005, 0.1)
    p["gb_s"], p["eb_s"] = bn(bottleneck_dim)
    p["wc_s"], p["bc_s"] = lin(keys[1], bottleneck_dim, bottleneck_dim, 0.005, 0.1)
    p["gc_s"], p["ec_s"] = bn(bottleneck_dim)
    p["w1_s"], p["b1_s"] = lin(keys[2], bottleneck_dim, bottleneck_dim, 0.005, 0.1)
    p["g1_s"], p["e1_s"] = bn(bottleneck_dim)
    p["w2_s"], p["b2_s"] = lin(keys[3], bottleneck_dim, bottleneck_dim, 0.005, 0.1)
    p["g2_s"], p["e2_s"] = bn(bottleneck_dim)
    p["wb_t"], p["bb_t"] = lin(keys[4], feature_dim, bottleneck_dim, 0.005, 0.1)
    p["gb_t"], p["eb_t"] = bn(bottleneck_dim)
    p["wc_t"], p["bc_t"] = lin(keys[5], bottleneck_dim, bottleneck_dim, 0.005, 0.1)
    p["gc_t"], p["ec_t"] = bn(bottleneck_dim)
    p["whs"], p["bhs"] = lin(keys[6], bottleneck_dim, class_num, 0.01, 0.0)
    p["bhs"] = jnp.zeros_like(p["bhs"])
    p["wht"], p["bht"] = lin(keys[7], bottleneck_dim, class_num, 0.01, 0.0)
    p["bht"] = jnp.zeros_like(p["bht"])
    return p


# ------------------------ pure-JAX reference (bf16 MXU) -----------------------
def rtn_forward_ref(feat_s, feat_t, p):
    bf16, f32 = jnp.bfloat16, jnp.float32

    def dot16(x, wt):
        return jnp.dot(x.astype(bf16), wt.astype(bf16),
                       preferred_element_type=f32)

    def block(x, wt, b, g, e):
        h = dot16(x, wt) + b
        mean = jnp.mean(h, axis=0, keepdims=True)
        var = jnp.mean((h - mean) ** 2, axis=0, keepdims=True)
        scale = g * jax.lax.rsqrt(var + BN_EPS)
        return jnp.maximum(h * scale + (e - mean * scale), 0.0)

    fcb_s = block(feat_s, p["wb_s"], p["bb_s"], p["gb_s"], p["eb_s"])
    fcb_t = block(feat_t, p["wb_t"], p["bb_t"], p["gb_t"], p["eb_t"])
    fcc_s = block(fcb_s, p["wc_s"], p["bc_s"], p["gc_s"], p["ec_s"])
    fcc_t = block(fcb_t, p["wc_t"], p["bc_t"], p["gc_t"], p["ec_t"])
    fc1_s = block(fcc_s, p["w1_s"], p["b1_s"], p["g1_s"], p["e1_s"])
    fc2_s = block(fc1_s, p["w2_s"], p["b2_s"], p["g2_s"], p["e2_s"])
    fc2_s_t = fc2_s + fcc_t
    logits_s = dot16(fc2_s_t, p["whs"]) + p["bhs"]
    logits_t = dot16(fcc_t, p["wht"]) + p["bht"]
    sm_s = jax.nn.softmax(logits_s, axis=1)
    sm_t = jax.nn.softmax(logits_t, axis=1)
    return logits_s, logits_t, sm_s, sm_t, fcb_s, fcc_s, fcb_t, fcc_t


# ------------------------------------ main ------------------------------------
if __name__ == "__main__":
    # Small, module-consistent shapes (stand-ins for ResNet50 F=2048, D=256, C=31).
    B = 8      # batch
    F = 256    # backbone feature dim
    D = 32     # bottleneck_dim
    C = 8      # class_num

    key = jax.random.PRNGKey(0)
    k_feat_s, k_feat_t, k_params = jax.random.split(key, 3)

    feat_s = jax.random.normal(k_feat_s, (B, F), dtype=jnp.float32)
    feat_t = jax.random.normal(k_feat_t, (B, F), dtype=jnp.float32)
    params = init_params(k_params, F, D, C)

    # One-time parameter packing (hoisted out of the per-call forward).
    packed = pack_params(params)

    refs = jax.block_until_ready(rtn_forward_ref(feat_s, feat_t, params))

    # Path 1: auto — single-shot kernel (whole padded F resident in VMEM).
    outs_single = jax.block_until_ready(rtn_forward(feat_s, feat_t, packed))
    # Path 2: forced K-tiled fallback (tk=128 -> 2 K-steps) to exercise the
    # pipelined accumulation path.
    outs_tiled = jax.block_until_ready(rtn_forward(feat_s, feat_t, packed, tk=128))

    for outs in (outs_single, outs_tiled):
        for o, r in zip(outs, refs):
            assert o.shape == r.shape and o.dtype == r.dtype
            assert jnp.allclose(o, r, atol=1e-2, rtol=1e-2), "mismatch vs reference"

    print("KERNEL_OK")
</pallas_src>

<mosaic_0001>
module attributes {stable_mosaic.version = 11 : i64} {
  func.func @rtn_kernel_single(%arg0: i32, %arg1: memref<8x256xbf16, #tpu.memory_space<vmem>>, %arg2: memref<8x256xbf16, #tpu.memory_space<vmem>>, %arg3: memref<256x128xbf16, #tpu.memory_space<vmem>>, %arg4: memref<256x128xbf16, #tpu.memory_space<vmem>>, %arg5: memref<1x128xf32, #tpu.memory_space<vmem>>, %arg6: memref<1x128xf32, #tpu.memory_space<vmem>>, %arg7: memref<128x128xbf16, #tpu.memory_space<vmem>>, %arg8: memref<1x128xf32, #tpu.memory_space<vmem>>, %arg9: memref<1x128xf32, #tpu.memory_space<vmem>>, %arg10: memref<128x128xbf16, #tpu.memory_space<vmem>>, %arg11: memref<1x128xf32, #tpu.memory_space<vmem>>, %arg12: memref<1x128xf32, #tpu.memory_space<vmem>>, %arg13: memref<128x128xbf16, #tpu.memory_space<vmem>>, %arg14: memref<1x128xf32, #tpu.memory_space<vmem>>, %arg15: memref<1x128xf32, #tpu.memory_space<vmem>>, %arg16: memref<1x128xf32, #tpu.memory_space<vmem>>, %arg17: memref<1x128xf32, #tpu.memory_space<vmem>>, %arg18: memref<128x128xbf16, #tpu.memory_space<vmem>>, %arg19: memref<1x128xf32, #tpu.memory_space<vmem>>, %arg20: memref<1x128xf32, #tpu.memory_space<vmem>>, %arg21: memref<128x128xbf16, #tpu.memory_space<vmem>>, %arg22: memref<1x128xf32, #tpu.memory_space<vmem>>, %arg23: memref<128x128xbf16, #tpu.memory_space<vmem>>, %arg24: memref<1x128xf32, #tpu.memory_space<vmem>>, %arg25: memref<8x128xf32, #tpu.memory_space<vmem>>, %arg26: memref<8x128xf32, #tpu.memory_space<vmem>>, %arg27: memref<8x128xf32, #tpu.memory_space<vmem>>, %arg28: memref<8x128xf32, #tpu.memory_space<vmem>>, %arg29: memref<8x128xf32, #tpu.memory_space<vmem>>, %arg30: memref<8x128xf32, #tpu.memory_space<vmem>>, %arg31: memref<8x128xf32, #tpu.memory_space<vmem>>, %arg32: memref<8x128xf32, #tpu.memory_space<vmem>>) attributes {dimension_semantics = [#tpu.dimension_semantics<arbitrary>], iteration_bounds = array<i64: 1>, scalar_prefetch = 0 : i64, scratch_operands = 0 : i64, tpu.core_type = #tpu.core_type<tc>, window_params = [{transform_indices = @transform_0, window_bounds = array<i64: 8, 256>}, {transform_indices = @transform_1, window_bounds = array<i64: 8, 256>}, {transform_indices = @transform_2, window_bounds = array<i64: 256, 128>}, {transform_indices = @transform_3, window_bounds = array<i64: 256, 128>}, {pipeline_mode = #tpu.pipeline_mode<synchronous>, transform_indices = @transform_4, window_bounds = array<i64: 1, 128>}, {pipeline_mode = #tpu.pipeline_mode<synchronous>, transform_indices = @transform_5, window_bounds = array<i64: 1, 128>}, {pipeline_mode = #tpu.pipeline_mode<synchronous>, transform_indices = @transform_6, window_bounds = array<i64: 128, 128>}, {pipeline_mode = #tpu.pipeline_mode<synchronous>, transform_indices = @transform_7, window_bounds = array<i64: 1, 128>}, {pipeline_mode = #tpu.pipeline_mode<synchronous>, transform_indices = @transform_8, window_bounds = array<i64: 1, 128>}, {pipeline_mode = #tpu.pipeline_mode<synchronous>, transform_indices = @transform_9, window_bounds = array<i64: 128, 128>}, {pipeline_mode = #tpu.pipeline_mode<synchronous>, transform_indices = @transform_10, window_bounds = array<i64: 1, 128>}, {pipeline_mode = #tpu.pipeline_mode<synchronous>, transform_indices = @transform_11, window_bounds = array<i64: 1, 128>}, {pipeline_mode = #tpu.pipeline_mode<synchronous>, transform_indices = @transform_12, window_bounds = array<i64: 128, 128>}, {pipeline_mode = #tpu.pipeline_mode<synchronous>, transform_indices = @transform_13, window_bounds = array<i64: 1, 128>}, {pipeline_mode = #tpu.pipeline_mode<synchronous>, transform_indices = @transform_14, window_bounds = array<i64: 1, 128>}, {pipeline_mode = #tpu.pipeline_mode<synchronous>, transform_indices = @transform_15, window_bounds = array<i64: 1, 128>}, {pipeline_mode = #tpu.pipeline_mode<synchronous>, transform_indices = @transform_16, window_bounds = array<i64: 1, 128>}, {pipeline_mode = #tpu.pipeline_mode<synchronous>, transform_indices = @transform_17, window_bounds = array<i64: 128, 128>}, {pipeline_mode = #tpu.pipeline_mode<synchronous>, transform_indices = @transform_18, window_bounds = array<i64: 1, 128>}, {pipeline_mode = #tpu.pipeline_mode<synchronous>, transform_indices = @transform_19, window_bounds = array<i64: 1, 128>}, {pipeline_mode = #tpu.pipeline_mode<synchronous>, transform_indices = @transform_20, window_bounds = array<i64: 128, 128>}, {pipeline_mode = #tpu.pipeline_mode<synchronous>, transform_indices = @transform_21, window_bounds = array<i64: 1, 128>}, {pipeline_mode = #tpu.pipeline_mode<synchronous>, transform_indices = @transform_22, window_bounds = array<i64: 128, 128>}, {pipeline_mode = #tpu.pipeline_mode<synchronous>, transform_indices = @transform_23, window_bounds = array<i64: 1, 128>}, {pipeline_mode = #tpu.pipeline_mode<synchronous>, transform_indices = @transform_24, window_bounds = array<i64: 8, 128>}, {pipeline_mode = #tpu.pipeline_mode<synchronous>, transform_indices = @transform_25, window_bounds = array<i64: 8, 128>}, {pipeline_mode = #tpu.pipeline_mode<synchronous>, transform_indices = @transform_26, window_bounds = array<i64: 8, 128>}, {pipeline_mode = #tpu.pipeline_mode<synchronous>, transform_indices = @transform_27, window_bounds = array<i64: 8, 128>}, {pipeline_mode = #tpu.pipeline_mode<synchronous>, transform_indices = @transform_28, window_bounds = array<i64: 8, 128>}, {pipeline_mode = #tpu.pipeline_mode<synchronous>, transform_indices = @transform_29, window_bounds = array<i64: 8, 128>}, {pipeline_mode = #tpu.pipeline_mode<synchronous>, transform_indices = @transform_30, window_bounds = array<i64: 8, 128>}, {pipeline_mode = #tpu.pipeline_mode<synchronous>, transform_indices = @transform_31, window_bounds = array<i64: 8, 128>}]} {
    %c0 = arith.constant 0 : index
    %c0_0 = arith.constant 0 : index
    %0 = vector.load %arg1[%c0, %c0_0] : memref<8x256xbf16, #tpu.memory_space<vmem>>, vector<8x256xbf16>
    %c0_1 = arith.constant 0 : index
    %c0_2 = arith.constant 0 : index
    %1 = vector.load %arg3[%c0_1, %c0_2] : memref<256x128xbf16, #tpu.memory_space<vmem>>, vector<256x128xbf16>
    %cst = arith.constant dense<0.000000e+00> : vector<8x128xf32>
    %2 = tpu.matmul %0, %1, %cst {dimension_numbers = #tpu.dot_dimension_numbers<[1], [0], [0], [1], [0, 0, 1, 1], [], []>} : vector<8x256xbf16>, vector<256x128xbf16>, vector<8x128xf32> -> vector<8x128xf32>
    %c0_3 = arith.constant 0 : index
    %c0_4 = arith.constant 0 : index
    %3 = vector.load %arg2[%c0_3, %c0_4] : memref<8x256xbf16, #tpu.memory_space<vmem>>, vector<8x256xbf16>
    %c0_5 = arith.constant 0 : index
    %c0_6 = arith.constant 0 : index
    %4 = vector.load %arg4[%c0_5, %c0_6] : memref<256x128xbf16, #tpu.memory_space<vmem>>, vector<256x128xbf16>
    %cst_7 = arith.constant dense<0.000000e+00> : vector<8x128xf32>
    %5 = tpu.matmul %3, %4, %cst_7 {dimension_numbers = #tpu.dot_dimension_numbers<[1], [0], [0], [1], [0, 0, 1, 1], [], []>} : vector<8x256xbf16>, vector<256x128xbf16>, vector<8x128xf32> -> vector<8x128xf32>
    %cst_8 = arith.constant dense<0.000000e+00> : vector<128xf32>
    %6 = vector.multi_reduction <add>, %2, %cst_8 [0] : vector<8x128xf32> to vector<128xf32>
    %7 = vector.shape_cast %6 : vector<128xf32> to vector<1x128xf32>
    %cst_9 = arith.constant 8.000000e+00 : f32
    %8 = vector.broadcast %cst_9 : f32 to vector<1x128xf32>
    %9 = arith.divf %7, %8 : vector<1x128xf32>
    %10 = vector.broadcast %9 : vector<1x128xf32> to vector<8x128xf32>
    %11 = arith.subf %2, %10 : vector<8x128xf32>
    %12 = vector.broadcast %9 : vector<1x128xf32> to vector<8x128xf32>
    %13 = arith.subf %2, %12 : vector<8x128xf32>
    %14 = arith.mulf %11, %13 : vector<8x128xf32>
    %cst_10 = arith.constant dense<0.000000e+00> : vector<128xf32>
    %15 = vector.multi_reduction <add>, %14, %cst_10 [0] : vector<8x128xf32> to vector<128xf32>
    %16 = vector.shape_cast %15 : vector<128xf32> to vector<1x128xf32>
    %cst_11 = arith.constant 8.000000e+00 : f32
    %17 = vector.broadcast %cst_11 : f32 to vector<1x128xf32>
    %18 = arith.divf %16, %17 : vector<1x128xf32>
    %c0_12 = arith.constant 0 : index
    %c0_13 = arith.constant 0 : index
    %19 = vector.load %arg5[%c0_12, %c0_13] : memref<1x128xf32, #tpu.memory_space<vmem>>, vector<1x128xf32>
    %cst_14 = arith.constant 9.99999974E-6 : f32
    %20 = vector.broadcast %cst_14 : f32 to vector<1x128xf32>
    %21 = arith.addf %18, %20 : vector<1x128xf32>
    %22 = math.rsqrt %21 : vector<1x128xf32>
    %23 = arith.mulf %19, %22 : vector<1x128xf32>
    %c0_15 = arith.constant 0 : index
    %c0_16 = arith.constant 0 : index
    %24 = vector.load %arg6[%c0_15, %c0_16] : memref<1x128xf32, #tpu.memory_space<vmem>>, vector<1x128xf32>
    %25 = arith.mulf %9, %23 : vector<1x128xf32>
    %26 = arith.subf %24, %25 : vector<1x128xf32>
    %27 = vector.broadcast %23 : vector<1x128xf32> to vector<8x128xf32>
    %28 = arith.mulf %2, %27 : vector<8x128xf32>
    %29 = vector.broadcast %26 : vector<1x128xf32> to vector<8x128xf32>
    %30 = arith.addf %28, %29 : vector<8x128xf32>
    %cst_17 = arith.constant 0.000000e+00 : f32
    %31 = vector.broadcast %cst_17 : f32 to vector<8x128xf32>
    %32 = arith.maximumf %30, %31 : vector<8x128xf32>
    %cst_18 = arith.constant dense<0.000000e+00> : vector<128xf32>
    %33 = vector.multi_reduction <add>, %5, %cst_18 [0] : vector<8x128xf32> to vector<128xf32>
    %34 = vector.shape_cast %33 : vector<128xf32> to vector<1x128xf32>
    %cst_19 = arith.constant 8.000000e+00 : f32
    %35 = vector.broadcast %cst_19 : f32 to vector<1x128xf32>
    %36 = arith.divf %34, %35 : vector<1x128xf32>
    %37 = vector.broadcast %36 : vector<1x128xf32> to vector<8x128xf32>
    %38 = arith.subf %5, %37 : vector<8x128xf32>
    %39 = vector.broadcast %36 : vector<1x128xf32> to vector<8x128xf32>
    %40 = arith.subf %5, %39 : vector<8x128xf32>
    %41 = arith.mulf %38, %40 : vector<8x128xf32>
    %cst_20 = arith.constant dense<0.000000e+00> : vector<128xf32>
    %42 = vector.multi_reduction <add>, %41, %cst_20 [0] : vector<8x128xf32> to vector<128xf32>
    %43 = vector.shape_cast %42 : vector<128xf32> to vector<1x128xf32>
    %cst_21 = arith.constant 8.000000e+00 : f32
    %44 = vector.broadcast %cst_21 : f32 to vector<1x128xf32>
    %45 = arith.divf %43, %44 : vector<1x128xf32>
    %c0_22 = arith.constant 0 : index
    %c0_23 = arith.constant 0 : index
    %46 = vector.load %arg16[%c0_22, %c0_23] : memref<1x128xf32, #tpu.memory_space<vmem>>, vector<1x128xf32>
    %cst_24 = arith.constant 9.99999974E-6 : f32
    %47 = vector.broadcast %cst_24 : f32 to vector<1x128xf32>
    %48 = arith.addf %45, %47 : vector<1x128xf32>
    %49 = math.rsqrt %48 : vector<1x128xf32>
    %50 = arith.mulf %46, %49 : vector<1x128xf32>
    %c0_25 = arith.constant 0 : index
    %c0_26 = arith.constant 0 : index
    %51 = vector.load %arg17[%c0_25, %c0_26] : memref<1x128xf32, #tpu.memory_space<vmem>>, vector<1x128xf32>
    %52 = arith.mulf %36, %50 : vector<1x128xf32>
    %53 = arith.subf %51, %52 : vector<1x128xf32>
    %54 = vector.broadcast %50 : vector<1x128xf32> to vector<8x128xf32>
    %55 = arith.mulf %5, %54 : vector<8x128xf32>
    %56 = vector.broadcast %53 : vector<1x128xf32> to vector<8x128xf32>
    %57 = arith.addf %55, %56 : vector<8x128xf32>
    %cst_27 = arith.constant 0.000000e+00 : f32
    %58 = vector.broadcast %cst_27 : f32 to vector<8x128xf32>
    %59 = arith.maximumf %57, %58 : vector<8x128xf32>
    %60 = arith.truncf %32 : vector<8x128xf32> to vector<8x128xbf16>
    %c0_28 = arith.constant 0 : index
    %c0_29 = arith.constant 0 : index
    %61 = vector.load %arg7[%c0_28, %c0_29] : memref<128x128xbf16, #tpu.memory_space<vmem>>, vector<128x128xbf16>
    %cst_30 = arith.constant dense<0.000000e+00> : vector<8x128xf32>
    %62 = tpu.matmul %60, %61, %cst_30 {dimension_numbers = #tpu.dot_dimension_numbers<[1], [0], [0], [1], [0, 0, 1, 1], [], []>} : vector<8x128xbf16>, vector<128x128xbf16>, vector<8x128xf32> -> vector<8x128xf32>
    %cst_31 = arith.constant dense<0.000000e+00> : vector<128xf32>
    %63 = vector.multi_reduction <add>, %62, %cst_31 [0] : vector<8x128xf32> to vector<128xf32>
    %64 = vector.shape_cast %63 : vector<128xf32> to vector<1x128xf32>
    %cst_32 = arith.constant 8.000000e+00 : f32
    %65 = vector.broadcast %cst_32 : f32 to vector<1x128xf32>
    %66 = arith.divf %64, %65 : vector<1x128xf32>
    %67 = vector.broadcast %66 : vector<1x128xf32> to vector<8x128xf32>
    %68 = arith.subf %62, %67 : vector<8x128xf32>
    %69 = vector.broadcast %66 : vector<1x128xf32> to vector<8x128xf32>
    %70 = arith.subf %62, %69 : vector<8x128xf32>
    %71 = arith.mulf %68, %70 : vector<8x128xf32>
    %cst_33 = arith.constant dense<0.000000e+00> : vector<128xf32>
    %72 = vector.multi_reduction <add>, %71, %cst_33 [0] : vector<8x128xf32> to vector<128xf32>
    %73 = vector.shape_cast %72 : vector<128xf32> to vector<1x128xf32>
    %cst_34 = arith.constant 8.000000e+00 : f32
    %74 = vector.broadcast %cst_34 : f32 to vector<1x128xf32>
    %75 = arith.divf %73, %74 : vector<1x128xf32>
    %c0_35 = arith.constant 0 : index
    %c0_36 = arith.constant 0 : index
    %76 = vector.load %arg8[%c0_35, %c0_36] : memref<1x128xf32, #tpu.memory_space<vmem>>, vector<1x128xf32>
    %cst_37 = arith.constant 9.99999974E-6 : f32
    %77 = vector.broadcast %cst_37 : f32 to vector<1x128xf32>
    %78 = arith.addf %75, %77 : vector<1x128xf32>
    %79 = math.rsqrt %78 : vector<1x128xf32>
    %80 = arith.mulf %76, %79 : vector<1x128xf32>
    %c0_38 = arith.constant 0 : index
    %c0_39 = arith.constant 0 : index
    %81 = vector.load %arg9[%c0_38, %c0_39] : memref<1x128xf32, #tpu.memory_space<vmem>>, vector<1x128xf32>
    %82 = arith.mulf %66, %80 : vector<1x128xf32>
    %83 = arith.subf %81, %82 : vector<1x128xf32>
    %84 = vector.broadcast %80 : vector<1x128xf32> to vector<8x128xf32>
    %85 = arith.mulf %62, %84 : vector<8x128xf32>
    %86 = vector.broadcast %83 : vector<1x128xf32> to vector<8x128xf32>
    %87 = arith.addf %85, %86 : vector<8x128xf32>
    %cst_40 = arith.constant 0.000000e+00 : f32
    %88 = vector.broadcast %cst_40 : f32 to vector<8x128xf32>
    %89 = arith.maximumf %87, %88 : vector<8x128xf32>
    %90 = arith.truncf %59 : vector<8x128xf32> to vector<8x128xbf16>
    %c0_41 = arith.constant 0 : index
    %c0_42 = arith.constant 0 : index
    %91 = vector.load %arg18[%c0_41, %c0_42] : memref<128x128xbf16, #tpu.memory_space<vmem>>, vector<128x128xbf16>
    %cst_43 = arith.constant dense<0.000000e+00> : vector<8x128xf32>
    %92 = tpu.matmul %90, %91, %cst_43 {dimension_numbers = #tpu.dot_dimension_numbers<[1], [0], [0], [1], [0, 0, 1, 1], [], []>} : vector<8x128xbf16>, vector<128x128xbf16>, vector<8x128xf32> -> vector<8x128xf32>
    %cst_44 = arith.constant dense<0.000000e+00> : vector<128xf32>
    %93 = vector.multi_reduction <add>, %92, %cst_44 [0] : vector<8x128xf32> to vector<128xf32>
    %94 = vector.shape_cast %93 : vector<128xf32> to vector<1x128xf32>
    %cst_45 = arith.constant 8.000000e+00 : f32
    %95 = vector.broadcast %cst_45 : f32 to vector<1x128xf32>
    %96 = arith.divf %94, %95 : vector<1x128xf32>
    %97 = vector.broadcast %96 : vector<1x128xf32> to vector<8x128xf32>
    %98 = arith.subf %92, %97 : vector<8x128xf32>
    %99 = vector.broadcast %96 : vector<1x128xf32> to vector<8x128xf32>
    %100 = arith.subf %92, %99 : vector<8x128xf32>
    %101 = arith.mulf %98, %100 : vector<8x128xf32>
    %cst_46 = arith.constant dense<0.000000e+00> : vector<128xf32>
    %102 = vector.multi_reduction <add>, %101, %cst_46 [0] : vector<8x128xf32> to vector<128xf32>
    %103 = vector.shape_cast %102 : vector<128xf32> to vector<1x128xf32>
    %cst_47 = arith.constant 8.000000e+00 : f32
    %104 = vector.broadcast %cst_47 : f32 to vector<1x128xf32>
    %105 = arith.divf %103, %104 : vector<1x128xf32>
    %c0_48 = arith.constant 0 : index
    %c0_49 = arith.constant 0 : index
    %106 = vector.load %arg19[%c0_48, %c0_49] : memref<1x128xf32, #tpu.memory_space<vmem>>, vector<1x128xf32>
    %cst_50 = arith.constant 9.99999974E-6 : f32
    %107 = vector.broadcast %cst_50 : f32 to vector<1x128xf32>
    %108 = arith.addf %105, %107 : vector<1x128xf32>
    %109 = math.rsqrt %108 : vector<1x128xf32>
    %110 = arith.mulf %106, %109 : vector<1x128xf32>
    %c0_51 = arith.constant 0 : index
    %c0_52 = arith.constant 0 : index
    %111 = vector.load %arg20[%c0_51, %c0_52] : memref<1x128xf32, #tpu.memory_space<vmem>>, vector<1x128xf32>
    %112 = arith.mulf %96, %110 : vector<1x128xf32>
    %113 = arith.subf %111, %112 : vector<1x128xf32>
    %114 = vector.broadcast %110 : vector<1x128xf32> to vector<8x128xf32>
    %115 = arith.mulf %92, %114 : vector<8x128xf32>
    %116 = vector.broadcast %113 : vector<1x128xf32> to vector<8x128xf32>
    %117 = arith.addf %115, %116 : vector<8x128xf32>
    %cst_53 = arith.constant 0.000000e+00 : f32
    %118 = vector.broadcast %cst_53 : f32 to vector<8x128xf32>
    %119 = arith.maximumf %117, %118 : vector<8x128xf32>
    %120 = arith.truncf %89 : vector<8x128xf32> to vector<8x128xbf16>
    %c0_54 = arith.constant 0 : index
    %c0_55 = arith.constant 0 : index
    %121 = vector.load %arg10[%c0_54, %c0_55] : memref<128x128xbf16, #tpu.memory_space<vmem>>, vector<128x128xbf16>
    %cst_56 = arith.constant dense<0.000000e+00> : vector<8x128xf32>
    %122 = tpu.matmul %120, %121, %cst_56 {dimension_numbers = #tpu.dot_dimension_numbers<[1], [0], [0], [1], [0, 0, 1, 1], [], []>} : vector<8x128xbf16>, vector<128x128xbf16>, vector<8x128xf32> -> vector<8x128xf32>
    %cst_57 = arith.constant dense<0.000000e+00> : vector<128xf32>
    %123 = vector.multi_reduction <add>, %122, %cst_57 [0] : vector<8x128xf32> to vector<128xf32>
    %124 = vector.shape_cast %123 : vector<128xf32> to vector<1x128xf32>
    %cst_58 = arith.constant 8.000000e+00 : f32
    %125 = vector.broadcast %cst_58 : f32 to vector<1x128xf32>
    %126 = arith.divf %124, %125 : vector<1x128xf32>
    %127 = vector.broadcast %126 : vector<1x128xf32> to vector<8x128xf32>
    %128 = arith.subf %122, %127 : vector<8x128xf32>
    %129 = vector.broadcast %126 : vector<1x128xf32> to vector<8x128xf32>
    %130 = arith.subf %122, %129 : vector<8x128xf32>
    %131 = arith.mulf %128, %130 : vector<8x128xf32>
    %cst_59 = arith.constant dense<0.000000e+00> : vector<128xf32>
    %132 = vector.multi_reduction <add>, %131, %cst_59 [0] : vector<8x128xf32> to vector<128xf32>
    %133 = vector.shape_cast %132 : vector<128xf32> to vector<1x128xf32>
    %cst_60 = arith.constant 8.000000e+00 : f32
    %134 = vector.broadcast %cst_60 : f32 to vector<1x128xf32>
    %135 = arith.divf %133, %134 : vector<1x128xf32>
    %c0_61 = arith.constant 0 : index
    %c0_62 = arith.constant 0 : index
    %136 = vector.load %arg11[%c0_61, %c0_62] : memref<1x128xf32, #tpu.memory_space<vmem>>, vector<1x128xf32>
    %cst_63 = arith.constant 9.99999974E-6 : f32
    %137 = vector.broadcast %cst_63 : f32 to vector<1x128xf32>
    %138 = arith.addf %135, %137 : vector<1x128xf32>
    %139 = math.rsqrt %138 : vector<1x128xf32>
    %140 = arith.mulf %136, %139 : vector<1x128xf32>
    %c0_64 = arith.constant 0 : index
    %c0_65 = arith.constant 0 : index
    %141 = vector.load %arg12[%c0_64, %c0_65] : memref<1x128xf32, #tpu.memory_space<vmem>>, vector<1x128xf32>
    %142 = arith.mulf %126, %140 : vector<1x128xf32>
    %143 = arith.subf %141, %142 : vector<1x128xf32>
    %144 = vector.broadcast %140 : vector<1x128xf32> to vector<8x128xf32>
    %145 = arith.mulf %122, %144 : vector<8x128xf32>
    %146 = vector.broadcast %143 : vector<1x128xf32> to vector<8x128xf32>
    %147 = arith.addf %145, %146 : vector<8x128xf32>
    %cst_66 = arith.constant 0.000000e+00 : f32
    %148 = vector.broadcast %cst_66 : f32 to vector<8x128xf32>
    %149 = arith.maximumf %147, %148 : vector<8x128xf32>
    %150 = arith.truncf %149 : vector<8x128xf32> to vector<8x128xbf16>
    %c0_67 = arith.constant 0 : index
    %c0_68 = arith.constant 0 : index
    %151 = vector.load %arg13[%c0_67, %c0_68] : memref<128x128xbf16, #tpu.memory_space<vmem>>, vector<128x128xbf16>
    %cst_69 = arith.constant dense<0.000000e+00> : vector<8x128xf32>
    %152 = tpu.matmul %150, %151, %cst_69 {dimension_numbers = #tpu.dot_dimension_numbers<[1], [0], [0], [1], [0, 0, 1, 1], [], []>} : vector<8x128xbf16>, vector<128x128xbf16>, vector<8x128xf32> -> vector<8x128xf32>
    %cst_70 = arith.constant dense<0.000000e+00> : vector<128xf32>
    %153 = vector.multi_reduction <add>, %152, %cst_70 [0] : vector<8x128xf32> to vector<128xf32>
    %154 = vector.shape_cast %153 : vector<128xf32> to vector<1x128xf32>
    %cst_71 = arith.constant 8.000000e+00 : f32
    %155 = vector.broadcast %cst_71 : f32 to vector<1x128xf32>
    %156 = arith.divf %154, %155 : vector<1x128xf32>
    %157 = vector.broadcast %156 : vector<1x128xf32> to vector<8x128xf32>
    %158 = arith.subf %152, %157 : vector<8x128xf32>
    %159 = vector.broadcast %156 : vector<1x128xf32> to vector<8x128xf32>
    %160 = arith.subf %152, %159 : vector<8x128xf32>
    %161 = arith.mulf %158, %160 : vector<8x128xf32>
    %cst_72 = arith.constant dense<0.000000e+00> : vector<128xf32>
    %162 = vector.multi_reduction <add>, %161, %cst_72 [0] : vector<8x128xf32> to vector<128xf32>
    %163 = vector.shape_cast %162 : vector<128xf32> to vector<1x128xf32>
    %cst_73 = arith.constant 8.000000e+00 : f32
    %164 = vector.broadcast %cst_73 : f32 to vector<1x128xf32>
    %165 = arith.divf %163, %164 : vector<1x128xf32>
    %c0_74 = arith.constant 0 : index
    %c0_75 = arith.constant 0 : index
    %166 = vector.load %arg14[%c0_74, %c0_75] : memref<1x128xf32, #tpu.memory_space<vmem>>, vector<1x128xf32>
    %cst_76 = arith.constant 9.99999974E-6 : f32
    %167 = vector.broadcast %cst_76 : f32 to vector<1x128xf32>
    %168 = arith.addf %165, %167 : vector<1x128xf32>
    %169 = math.rsqrt %168 : vector<1x128xf32>
    %170 = arith.mulf %166, %169 : vector<1x128xf32>
    %c0_77 = arith.constant 0 : index
    %c0_78 = arith.constant 0 : index
    %171 = vector.load %arg15[%c0_77, %c0_78] : memref<1x128xf32, #tpu.memory_space<vmem>>, vector<1x128xf32>
    %172 = arith.mulf %156, %170 : vector<1x128xf32>
    %173 = arith.subf %171, %172 : vector<1x128xf32>
    %174 = vector.broadcast %170 : vector<1x128xf32> to vector<8x128xf32>
    %175 = arith.mulf %152, %174 : vector<8x128xf32>
    %176 = vector.broadcast %173 : vector<1x128xf32> to vector<8x128xf32>
    %177 = arith.addf %175, %176 : vector<8x128xf32>
    %cst_79 = arith.constant 0.000000e+00 : f32
    %178 = vector.broadcast %cst_79 : f32 to vector<8x128xf32>
    %179 = arith.maximumf %177, %178 : vector<8x128xf32>
    %180 = arith.addf %179, %119 : vector<8x128xf32>
    %181 = arith.truncf %180 : vector<8x128xf32> to vector<8x128xbf16>
    %c0_80 = arith.constant 0 : index
    %c0_81 = arith.constant 0 : index
    %182 = vector.load %arg21[%c0_80, %c0_81] : memref<128x128xbf16, #tpu.memory_space<vmem>>, vector<128x128xbf16>
    %cst_82 = arith.constant dense<0.000000e+00> : vector<8x128xf32>
    %183 = tpu.matmul %181, %182, %cst_82 {dimension_numbers = #tpu.dot_dimension_numbers<[1], [0], [0], [1], [0, 0, 1, 1], [], []>} : vector<8x128xbf16>, vector<128x128xbf16>, vector<8x128xf32> -> vector<8x128xf32>
    %c0_83 = arith.constant 0 : index
    %c0_84 = arith.constant 0 : index
    %184 = vector.load %arg22[%c0_83, %c0_84] : memref<1x128xf32, #tpu.memory_space<vmem>>, vector<1x128xf32>
    %185 = vector.broadcast %184 : vector<1x128xf32> to vector<8x128xf32>
    %186 = arith.addf %183, %185 : vector<8x128xf32>
    %187 = arith.truncf %119 : vector<8x128xf32> to vector<8x128xbf16>
    %c0_85 = arith.constant 0 : index
    %c0_86 = arith.constant 0 : index
    %188 = vector.load %arg23[%c0_85, %c0_86] : memref<128x128xbf16, #tpu.memory_space<vmem>>, vector<128x128xbf16>
    %cst_87 = arith.constant dense<0.000000e+00> : vector<8x128xf32>
    %189 = tpu.matmul %187, %188, %cst_87 {dimension_numbers = #tpu.dot_dimension_numbers<[1], [0], [0], [1], [0, 0, 1, 1], [], []>} : vector<8x128xbf16>, vector<128x128xbf16>, vector<8x128xf32> -> vector<8x128xf32>
    %c0_88 = arith.constant 0 : index
    %c0_89 = arith.constant 0 : index
    %190 = vector.load %arg24[%c0_88, %c0_89] : memref<1x128xf32, #tpu.memory_space<vmem>>, vector<1x128xf32>
    %191 = vector.broadcast %190 : vector<1x128xf32> to vector<8x128xf32>
    %192 = arith.addf %189, %191 : vector<8x128xf32>
    %193 = tpu.iota {dimensions = array<i32: 1>} : vector<8x128xi32>
    %c8_i32 = arith.constant 8 : i32
    %194 = vector.broadcast %c8_i32 : i32 to vector<8x128xi32>
    %195 = arith.cmpi slt, %193, %194 : vector<8x128xi32>
    %c0_90 = arith.constant 0 : index
    %c0_91 = arith.constant 0 : index
    %196 = vector.load %arg25[%c0_90, %c0_91] : memref<8x128xf32, #tpu.memory_space<vmem>>, vector<8x128xf32>
    tpu.vector_store %arg25[%c0_90, %c0_91], %186 {strides = array<i32>} : memref<8x128xf32, #tpu.memory_space<vmem>>, vector<8x128xf32>,
    %c0_92 = arith.constant 0 : index
    %c0_93 = arith.constant 0 : index
    %197 = vector.load %arg26[%c0_92, %c0_93] : memref<8x128xf32, #tpu.memory_space<vmem>>, vector<8x128xf32>
    tpu.vector_store %arg26[%c0_92, %c0_93], %192 {strides = array<i32>} : memref<8x128xf32, #tpu.memory_space<vmem>>, vector<8x128xf32>,
    %cst_94 = arith.constant -1.000000e+30 : f32
    %198 = vector.broadcast %cst_94 : f32 to vector<8x128xf32>
    %199 = arith.select %195, %186, %198 : vector<8x128xi1>, vector<8x128xf32>
    %cst_95 = arith.constant dense<0xFF800000> : vector<8xf32>
    %200 = vector.multi_reduction <maximumf>, %199, %cst_95 [1] : vector<8x128xf32> to vector<8xf32>
    %201 = vector.shape_cast %200 : vector<8xf32> to vector<8x1xf32>
    %202 = vector.broadcast %201 : vector<8x1xf32> to vector<8x128xf32>
    %203 = arith.subf %199, %202 : vector<8x128xf32>
    %204 = math.exp %203 : vector<8x128xf32>
    %cst_96 = arith.constant 0.000000e+00 : f32
    %205 = vector.broadcast %cst_96 : f32 to vector<8x128xf32>
    %206 = arith.select %195, %204, %205 : vector<8x128xi1>, vector<8x128xf32>
    %cst_97 = arith.constant dense<0.000000e+00> : vector<8xf32>
    %207 = vector.multi_reduction <add>, %206, %cst_97 [1] : vector<8x128xf32> to vector<8xf32>
    %208 = vector.shape_cast %207 : vector<8xf32> to vector<8x1xf32>
    %209 = tpu.reciprocal %208 {approx = true} : vector<8x1xf32> -> vector<8x1xf32>
    %210 = vector.broadcast %209 : vector<8x1xf32> to vector<8x128xf32>
    %211 = arith.mulf %206, %210 : vector<8x128xf32>
    %c0_98 = arith.constant 0 : index
    %c0_99 = arith.constant 0 : index
    %212 = vector.load %arg27[%c0_98, %c0_99] : memref<8x128xf32, #tpu.memory_space<vmem>>, vector<8x128xf32>
    tpu.vector_store %arg27[%c0_98, %c0_99], %211 {strides = array<i32>} : memref<8x128xf32, #tpu.memory_space<vmem>>, vector<8x128xf32>,
    %cst_100 = arith.constant -1.000000e+30 : f32
    %213 = vector.broadcast %cst_100 : f32 to vector<8x128xf32>
    %214 = arith.select %195, %192, %213 : vector<8x128xi1>, vector<8x128xf32>
    %cst_101 = arith.constant dense<0xFF800000> : vector<8xf32>
    %215 = vector.multi_reduction <maximumf>, %214, %cst_101 [1] : vector<8x128xf32> to vector<8xf32>
    %216 = vector.shape_cast %215 : vector<8xf32> to vector<8x1xf32>
    %217 = vector.broadcast %216 : vector<8x1xf32> to vector<8x128xf32>
    %218 = arith.subf %214, %217 : vector<8x128xf32>
    %219 = math.exp %218 : vector<8x128xf32>
    %cst_102 = arith.constant 0.000000e+00 : f32
    %220 = vector.broadcast %cst_102 : f32 to vector<8x128xf32>
    %221 = arith.select %195, %219, %220 : vector<8x128xi1>, vector<8x128xf32>
    %cst_103 = arith.constant dense<0.000000e+00> : vector<8xf32>
    %222 = vector.multi_reduction <add>, %221, %cst_103 [1] : vector<8x128xf32> to vector<8xf32>
    %223 = vector.shape_cast %222 : vector<8xf32> to vector<8x1xf32>
    %224 = tpu.reciprocal %223 {approx = true} : vector<8x1xf32> -> vector<8x1xf32>
    %225 = vector.broadcast %224 : vector<8x1xf32> to vector<8x128xf32>
    %226 = arith.mulf %221, %225 : vector<8x128xf32>
    %c0_104 = arith.constant 0 : index
    %c0_105 = arith.constant 0 : index
    %227 = vector.load %arg28[%c0_104, %c0_105] : memref<8x128xf32, #tpu.memory_space<vmem>>, vector<8x128xf32>
    tpu.vector_store %arg28[%c0_104, %c0_105], %226 {strides = array<i32>} : memref<8x128xf32, #tpu.memory_space<vmem>>, vector<8x128xf32>,
    %c0_106 = arith.constant 0 : index
    %c0_107 = arith.constant 0 : index
    %228 = vector.load %arg29[%c0_106, %c0_107] : memref<8x128xf32, #tpu.memory_space<vmem>>, vector<8x128xf32>
    tpu.vector_store %arg29[%c0_106, %c0_107], %32 {strides = array<i32>} : memref<8x128xf32, #tpu.memory_space<vmem>>, vector<8x128xf32>,
    %c0_108 = arith.constant 0 : index
    %c0_109 = arith.constant 0 : index
    %229 = vector.load %arg30[%c0_108, %c0_109] : memref<8x128xf32, #tpu.memory_space<vmem>>, vector<8x128xf32>
    tpu.vector_store %arg30[%c0_108, %c0_109], %89 {strides = array<i32>} : memref<8x128xf32, #tpu.memory_space<vmem>>, vector<8x128xf32>,
    %c0_110 = arith.constant 0 : index
    %c0_111 = arith.constant 0 : index
    %230 = vector.load %arg31[%c0_110, %c0_111] : memref<8x128xf32, #tpu.memory_space<vmem>>, vector<8x128xf32>
    tpu.vector_store %arg31[%c0_110, %c0_111], %59 {strides = array<i32>} : memref<8x128xf32, #tpu.memory_space<vmem>>, vector<8x128xf32>,
    %c0_112 = arith.constant 0 : index
    %c0_113 = arith.constant 0 : index
    %231 = vector.load %arg32[%c0_112, %c0_113] : memref<8x128xf32, #tpu.memory_space<vmem>>, vector<8x128xf32>
    tpu.vector_store %arg32[%c0_112, %c0_113], %119 {strides = array<i32>} : memref<8x128xf32, #tpu.memory_space<vmem>>, vector<8x128xf32>,
    return
  }
  func.func @transform_0(%arg0: i32) -> (i32, i32) {
    %c0_i32 = arith.constant 0 : i32
    %c0_i32_0 = arith.constant 0 : i32
    return %c0_i32, %arg0 : i32, i32
  }
  func.func @transform_1(%arg0: i32) -> (i32, i32) {
    %c0_i32 = arith.constant 0 : i32
    %c0_i32_0 = arith.constant 0 : i32
    return %c0_i32, %arg0 : i32, i32
  }
  func.func @transform_2(%arg0: i32) -> (i32, i32) {
    %c0_i32 = arith.constant 0 : i32
    %c0_i32_0 = arith.constant 0 : i32
    return %arg0, %c0_i32 : i32, i32
  }
  func.func @transform_3(%arg0: i32) -> (i32, i32) {
    %c0_i32 = arith.constant 0 : i32
    %c0_i32_0 = arith.constant 0 : i32
    return %arg0, %c0_i32 : i32, i32
  }
  func.func @transform_4(%arg0: i32) -> (i32, i32) {
    %c0_i32 = arith.constant 0 : i32
    %c0_i32_0 = arith.constant 0 : i32
    %c0_i32_1 = arith.constant 0 : i32
    return %c0_i32, %c0_i32_0 : i32, i32
  }
  func.func @transform_5(%arg0: i32) -> (i32, i32) {
    %c0_i32 = arith.constant 0 : i32
    %c0_i32_0 = arith.constant 0 : i32
    %c0_i32_1 = arith.constant 0 : i32
    return %c0_i32, %c0_i32_0 : i32, i32
  }
  func.func @transform_6(%arg0: i32) -> (i32, i32) {
    %c0_i32 = arith.constant 0 : i32
    %c0_i32_0 = arith.constant 0 : i32
    %c0_i32_1 = arith.constant 0 : i32
    return %c0_i32, %c0_i32_0 : i32, i32
  }
  func.func @transform_7(%arg0: i32) -> (i32, i32) {
    %c0_i32 = arith.constant 0 : i32
    %c0_i32_0 = arith.constant 0 : i32
    %c0_i32_1 = arith.constant 0 : i32
    return %c0_i32, %c0_i32_0 : i32, i32
  }
  func.func @transform_8(%arg0: i32) -> (i32, i32) {
    %c0_i32 = arith.constant 0 : i32
    %c0_i32_0 = arith.constant 0 : i32
    %c0_i32_1 = arith.constant 0 : i32
    return %c0_i32, %c0_i32_0 : i32, i32
  }
  func.func @transform_9(%arg0: i32) -> (i32, i32) {
    %c0_i32 = arith.constant 0 : i32
    %c0_i32_0 = arith.constant 0 : i32
    %c0_i32_1 = arith.constant 0 : i32
    return %c0_i32, %c0_i32_0 : i32, i32
  }
  func.func @transform_10(%arg0: i32) -> (i32, i32) {
    %c0_i32 = arith.constant 0 : i32
    %c0_i32_0 = arith.constant 0 : i32
    %c0_i32_1 = arith.constant 0 : i32
    return %c0_i32, %c0_i32_0 : i32, i32
  }
  func.func @transform_11(%arg0: i32) -> (i32, i32) {
    %c0_i32 = arith.constant 0 : i32
    %c0_i32_0 = arith.constant 0 : i32
    %c0_i32_1 = arith.constant 0 : i32
    return %c0_i32, %c0_i32_0 : i32, i32
  }
  func.func @transform_12(%arg0: i32) -> (i32, i32) {
    %c0_i32 = arith.constant 0 : i32
    %c0_i32_0 = arith.constant 0 : i32
    %c0_i32_1 = arith.constant 0 : i32
    return %c0_i32, %c0_i32_0 : i32, i32
  }
  func.func @transform_13(%arg0: i32) -> (i32, i32) {
    %c0_i32 = arith.constant 0 : i32
    %c0_i32_0 = arith.constant 0 : i32
    %c0_i32_1 = arith.constant 0 : i32
    return %c0_i32, %c0_i32_0 : i32, i32
  }
  func.func @transform_14(%arg0: i32) -> (i32, i32) {
    %c0_i32 = arith.constant 0 : i32
    %c0_i32_0 = arith.constant 0 : i32
    %c0_i32_1 = arith.constant 0 : i32
    return %c0_i32, %c0_i32_0 : i32, i32
  }
  func.func @transform_15(%arg0: i32) -> (i32, i32) {
    %c0_i32 = arith.constant 0 : i32
    %c0_i32_0 = arith.constant 0 : i32
    %c0_i32_1 = arith.constant 0 : i32
    return %c0_i32, %c0_i32_0 : i32, i32
  }
  func.func @transform_16(%arg0: i32) -> (i32, i32) {
    %c0_i32 = arith.constant 0 : i32
    %c0_i32_0 = arith.constant 0 : i32
    %c0_i32_1 = arith.constant 0 : i32
    return %c0_i32, %c0_i32_0 : i32, i32
  }
  func.func @transform_17(%arg0: i32) -> (i32, i32) {
    %c0_i32 = arith.constant 0 : i32
    %c0_i32_0 = arith.constant 0 : i32
    %c0_i32_1 = arith.constant 0 : i32
    return %c0_i32, %c0_i32_0 : i32, i32
  }
  func.func @transform_18(%arg0: i32) -> (i32, i32) {
    %c0_i32 = arith.constant 0 : i32
    %c0_i32_0 = arith.constant 0 : i32
    %c0_i32_1 = arith.constant 0 : i32
    return %c0_i32, %c0_i32_0 : i32, i32
  }
  func.func @transform_19(%arg0: i32) -> (i32, i32) {
    %c0_i32 = arith.constant 0 : i32
    %c0_i32_0 = arith.constant 0 : i32
    %c0_i32_1 = arith.constant 0 : i32
    return %c0_i32, %c0_i32_0 : i32, i32
  }
  func.func @transform_20(%arg0: i32) -> (i32, i32) {
    %c0_i32 = arith.constant 0 : i32
    %c0_i32_0 = arith.constant 0 : i32
    %c0_i32_1 = arith.constant 0 : i32
    return %c0_i32, %c0_i32_0 : i32, i32
  }
  func.func @transform_21(%arg0: i32) -> (i32, i32) {
    %c0_i32 = arith.constant 0 : i32
    %c0_i32_0 = arith.constant 0 : i32
    %c0_i32_1 = arith.constant 0 : i32
    return %c0_i32, %c0_i32_0 : i32, i32
  }
  func.func @transform_22(%arg0: i32) -> (i32, i32) {
    %c0_i32 = arith.constant 0 : i32
    %c0_i32_0 = arith.constant 0 : i32
    %c0_i32_1 = arith.constant 0 : i32
    return %c0_i32, %c0_i32_0 : i32, i32
  }
  func.func @transform_23(%arg0: i32) -> (i32, i32) {
    %c0_i32 = arith.constant 0 : i32
    %c0_i32_0 = arith.constant 0 : i32
    %c0_i32_1 = arith.constant 0 : i32
    return %c0_i32, %c0_i32_0 : i32, i32
  }
  func.func @transform_24(%arg0: i32) -> (i32, i32) {
    %c0_i32 = arith.constant 0 : i32
    %c0_i32_0 = arith.constant 0 : i32
    %c0_i32_1 = arith.constant 0 : i32
    return %c0_i32, %c0_i32_0 : i32, i32
  }
  func.func @transform_25(%arg0: i32) -> (i32, i32) {
    %c0_i32 = arith.constant 0 : i32
    %c0_i32_0 = arith.constant 0 : i32
    %c0_i32_1 = arith.constant 0 : i32
    return %c0_i32, %c0_i32_0 : i32, i32
  }
  func.func @transform_26(%arg0: i32) -> (i32, i32) {
    %c0_i32 = arith.constant 0 : i32
    %c0_i32_0 = arith.constant 0 : i32
    %c0_i32_1 = arith.constant 0 : i32
    return %c0_i32, %c0_i32_0 : i32, i32
  }
  func.func @transform_27(%arg0: i32) -> (i32, i32) {
    %c0_i32 = arith.constant 0 : i32
    %c0_i32_0 = arith.constant 0 : i32
    %c0_i32_1 = arith.constant 0 : i32
    return %c0_i32, %c0_i32_0 : i32, i32
  }
  func.func @transform_28(%arg0: i32) -> (i32, i32) {
    %c0_i32 = arith.constant 0 : i32
    %c0_i32_0 = arith.constant 0 : i32
    %c0_i32_1 = arith.constant 0 : i32
    return %c0_i32, %c0_i32_0 : i32, i32
  }
  func.func @transform_29(%arg0: i32) -> (i32, i32) {
    %c0_i32 = arith.constant 0 : i32
    %c0_i32_0 = arith.constant 0 : i32
    %c0_i32_1 = arith.constant 0 : i32
    return %c0_i32, %c0_i32_0 : i32, i32
  }
  func.func @transform_30(%arg0: i32) -> (i32, i32) {
    %c0_i32 = arith.constant 0 : i32
    %c0_i32_0 = arith.constant 0 : i32
    %c0_i32_1 = arith.constant 0 : i32
    return %c0_i32, %c0_i32_0 : i32, i32
  }
  func.func @transform_31(%arg0: i32) -> (i32, i32) {
    %c0_i32 = arith.constant 0 : i32
    %c0_i32_0 = arith.constant 0 : i32
    %c0_i32_1 = arith.constant 0 : i32
    return %c0_i32, %c0_i32_0 : i32, i32
  }
}

</mosaic_0001>

<llo_original>
// kernel: tpu_custom_call.1
$region0: #{tpu_custom_call.1}
  #allocation0 [shape = 'u32[]', space=smem, size = 0x4, offset = 0x4, fixed_abs, tag = 'smem constant byte address 0x4 - core index']
  #allocation1 [shape = 'u32[144,128]{1,0:T(1,128)}', space=vmem, size = 0x12000, scoped, tag = 'internal scratch']
  %s0 = inlined_call_operand.smem [shape: u32[32], index: -1, kind: input, shape index: {}]
  %s1 = sld [smem:[%s0]]
  %s2 = scalar_lea.smem %s0, 1
  %s3 = sld [smem:[%s2]]
  %s4 = scalar_lea.smem %s0, 2
  %s5 = sld [smem:[%s4]]
  %s6 = scalar_lea.smem %s0, 3
  %s7 = sld [smem:[%s6]]
  %s8 = scalar_lea.smem %s0, 4
  %s9 = sld [smem:[%s8]]
  %s10 = scalar_lea.smem %s0, 5
  %s11 = sld [smem:[%s10]]
  %s12 = scalar_lea.smem %s0, 6
  %s13 = sld [smem:[%s12]]
  %s14 = scalar_lea.smem %s0, 7
  %s15 = sld [smem:[%s14]]
  %s16 = scalar_lea.smem %s0, 8
  %s17 = sld [smem:[%s16]]
  %s18 = scalar_lea.smem %s0, 9
  %s19 = sld [smem:[%s18]]
  %s20 = scalar_lea.smem %s0, 10
  %s21 = sld [smem:[%s20]]
  %s22 = scalar_lea.smem %s0, 11
  %s23 = sld [smem:[%s22]]
  %s24 = scalar_lea.smem %s0, 12
  %s25 = sld [smem:[%s24]]
  %s26 = scalar_lea.smem %s0, 13
  %s27 = sld [smem:[%s26]]
  %s28 = scalar_lea.smem %s0, 14
  %s29 = sld [smem:[%s28]]
  %s30 = scalar_lea.smem %s0, 15
  %s31 = sld [smem:[%s30]]
  %s32 = scalar_lea.smem %s0, 16
  %s33 = sld [smem:[%s32]]
  %s34 = scalar_lea.smem %s0, 17
  %s35 = sld [smem:[%s34]]
  %s36 = scalar_lea.smem %s0, 18
  %s37 = sld [smem:[%s36]]
  %s38 = scalar_lea.smem %s0, 19
  %s39 = sld [smem:[%s38]]
  %s40 = scalar_lea.smem %s0, 20
  %s41 = sld [smem:[%s40]]
  %s42 = scalar_lea.smem %s0, 21
  %s43 = sld [smem:[%s42]]
  %s44 = scalar_lea.smem %s0, 22
  %s45 = sld [smem:[%s44]]
  %s46 = scalar_lea.smem %s0, 23
  %s47 = sld [smem:[%s46]]
  %s48 = scalar_lea.smem %s0, 24
  %s49 = sld [smem:[%s48]]
  %s50 = scalar_lea.smem %s0, 25
  %s51 = sld [smem:[%s50]]
  %s52 = scalar_lea.smem %s0, 26
  %s53 = sld [smem:[%s52]]
  %s54 = scalar_lea.smem %s0, 27
  %s55 = sld [smem:[%s54]]
  %s56 = scalar_lea.smem %s0, 28
  %s57 = sld [smem:[%s56]]
  %s58 = scalar_lea.smem %s0, 29
  %s59 = sld [smem:[%s58]]
  %s60 = scalar_lea.smem %s0, 30
  %s61 = sld [smem:[%s60]]
  %s62 = scalar_lea.smem %s0, 31
  %s63 = sld [smem:[%s62]]
  %64 = xla_tuple %s49, %s51, %s53, %s55, %s57, %s59, %s61, %s63
  %s65 = sld [smem:[#allocation0]]
  $region238: #{tpu_custom_call.1} parent=0
    _
  %s67 = ssub.s32 1, %s65
  %s68 = scalar_select 0, %s67, %s65
  $region1: #{tpu_custom_call.1} parent=0
    #allocation2 [shape = 'u8[4096]{0}', space=vmem, size = 0x1000, scoped, tag = 'input window, operand 0, single buffered']
    #allocation3 [shape = 's32[1]{0}', space=sflag, size = 0x4, scoped, tag = 'scoped memory for tpu_custom_call.1']
    #allocation4 [shape = 's32[1]{0}', space=sflag, size = 0x4, scoped, tag = 'scoped memory for tpu_custom_call.1']
    #allocation5 [shape = 'u8[4096]{0}', space=vmem, size = 0x1000, scoped, tag = 'input window, operand 1, single buffered']
    #allocation6 [shape = 's32[1]{0}', space=sflag, size = 0x4, scoped, tag = 'scoped memory for tpu_custom_call.1']
    #allocation7 [shape = 'u8[65536]{0}', space=vmem, size = 0x10000, scoped, tag = 'input window, operand 2, single buffered']
    #allocation8 [shape = 'u8[65536]{0}', space=vmem, size = 0x10000, scoped, tag = 'input window, operand 3, single buffered']
    #allocation9 [shape = 's32[1]{0}', space=sflag, size = 0x4, scoped, tag = 'scoped memory for tpu_custom_call.1']
    #allocation10 [shape = 'u8[512]{0}', space=vmem, size = 0x400, scoped, tag = 'input window, operand 4, single buffered']
    #allocation11 [shape = 'u8[512]{0}', space=vmem, size = 0x400, scoped, tag = 'input window, operand 5, single buffered']
    #allocation12 [shape = 's32[1]{0}', space=sflag, size = 0x4, scoped, tag = 'scoped memory for tpu_custom_call.1']
    #allocation13 [shape = 'u8[32768]{0}', space=vmem, size = 0x8000, scoped, tag = 'input window, operand 6, single buffered']
    #allocation14 [shape = 'u8[512]{0}', space=vmem, size = 0x400, scoped, tag = 'input window, operand 7, single buffered']
    #allocation15 [shape = 's32[1]{0}', space=sflag, size = 0x4, scoped, tag = 'scoped memory for tpu_custom_call.1']
    #allocation16 [shape = 'u8[512]{0}', space=vmem, size = 0x400, scoped, tag = 'input window, operand 8, single buffered']
    #allocation17 [shape = 'u8[32768]{0}', space=vmem, size = 0x8000, scoped, tag = 'input window, operand 9, single buffered']
    #allocation18 [shape = 's32[1]{0}', space=sflag, size = 0x4, scoped, tag = 'scoped memory for tpu_custom_call.1']
    #allocation19 [shape = 'u8[512]{0}', space=vmem, size = 0x400, scoped, tag = 'input window, operand 10, single buffered']
    #allocation20 [shape = 'u8[512]{0}', space=vmem, size = 0x400, scoped, tag = 'input window, operand 11, single buffered']
    #allocation21 [shape = 's32[1]{0}', space=sflag, size = 0x4, scoped, tag = 'scoped memory for tpu_custom_call.1']
    #allocation22 [shape = 'u8[32768]{0}', space=vmem, size = 0x8000, scoped, tag = 'input window, operand 12, single buffered']
    #allocation23 [shape = 'u8[512]{0}', space=vmem, size = 0x400, scoped, tag = 'input window, operand 13, single buffered']
    #allocation24 [shape = 's32[1]{0}', space=sflag, size = 0x4, scoped, tag = 'scoped memory for tpu_custom_call.1']
    #allocation25 [shape = 'u8[512]{0}', space=vmem, size = 0x400, scoped, tag = 'input window, operand 14, single buffered']
    #allocation26 [shape = 'u8[512]{0}', space=vmem, size = 0x400, scoped, tag = 'input window, operand 15, single buffered']
    #allocation27 [shape = 's32[1]{0}', space=sflag, size = 0x4, scoped, tag = 'scoped memory for tpu_custom_call.1']
    #allocation28 [shape = 'u8[512]{0}', space=vmem, size = 0x400, scoped, tag = 'input window, operand 16, single buffered']
    #allocation29 [shape = 'u8[32768]{0}', space=vmem, size = 0x8000, scoped, tag = 'input window, operand 20, single buffered']
    #allocation30 [shape = 's32[1]{0}', space=sflag, size = 0x4, scoped, tag = 'scoped memory for tpu_custom_call.1']
    #allocation31 [shape = 'u8[32768]{0}', space=vmem, size = 0x8000, scoped, tag = 'input window, operand 22, single buffered']
    #allocation32 [shape = 'u8[4096]{0}', space=vmem, size = 0x1000, scoped, tag = 'output window, operand 0, single buffered']
    #allocation33 [shape = 'u8[4096]{0}', space=vmem, size = 0x1000, scoped, tag = 'output window, operand 1, single buffered']
    #allocation34 [shape = 's32[1]{0}', space=sflag, size = 0x4, scoped, tag = 'scoped memory for tpu_custom_call.1']
    #allocation35 [shape = 'u8[4096]{0}', space=vmem, size = 0x1000, scoped, tag = 'output window, operand 2, single buffered']
    #allocation36 [shape = 'u8[4096]{0}', space=vmem, size = 0x1000, scoped, tag = 'output window, operand 3, single buffered']
    #allocation37 [shape = 's32[1]{0}', space=sflag, size = 0x4, scoped, tag = 'scoped memory for tpu_custom_call.1']
    #allocation38 [shape = 'u8[4096]{0}', space=vmem, size = 0x1000, scoped, tag = 'output window, operand 4, single buffered']
    #allocation39 [shape = 'u8[4096]{0}', space=vmem, size = 0x1000, scoped, tag = 'output window, operand 5, single buffered']
    #allocation40 [shape = 's32[1]{0}', space=sflag, size = 0x4, scoped, tag = 'scoped memory for tpu_custom_call.1']
    #allocation41 [shape = 'u8[4096]{0}', space=vmem, size = 0x1000, scoped, tag = 'output window, operand 6, single buffered']
    #allocation42 [shape = 'u8[4096]{0}', space=vmem, size = 0x1000, scoped, tag = 'output window, operand 7, single buffered']
    #allocation43 [shape = 's32[1]{0}', space=sflag, size = 0x4, scoped, tag = 'scoped memory for tpu_custom_call.1']
    %69 = vsyncpa [#allocation3], 0
    %70 = vsyncpa [#allocation6], 0
    %71 = vsyncpa [#allocation9], 0
    %72 = vsyncpa [#allocation12], 0
    %73 = vsyncpa [#allocation15], 0
    %74 = vsyncpa [#allocation18], 0
    %75 = vsyncpa [#allocation21], 0
    %76 = vsyncpa [#allocation24], 0
    %77 = vsyncpa [#allocation27], 0
    %78 = vsyncpa [#allocation30], 0
    %79 = vsyncpa [#allocation4], 0
    %80 = vsyncpa [#allocation34], 0
    %81 = vsyncpa [#allocation37], 0
    %82 = vsyncpa [#allocation40], 0
    %83 = vsyncpa [#allocation43], 0
    // Predicated region
    $region2: #{tpu_custom_call.1} parent=1 // pred_check
      _
    $region3: #{tpu_custom_call.1} parent=1 // pred_check_branch
      %85 = sbr.rel (0) target = $region5
    $region4: #{tpu_custom_call.1} parent=1 // pred_region
      %s87 = ssub.s32 128, 128
      %88 = vsyncadd [#allocation3], %s87
      %s90 = sshll.u32 [#allocation2], 4
      %s91 = int_to_ptr.vmem [resolvable:$true] %s90
      %93 = dma.hbm_to_vmem [thread:$0]  %s1, 128, %s91, [#allocation3]
    $region5: #{tpu_custom_call.1} parent=1 // pred_fallthru
      _
    // Predicated region
    $region6: #{tpu_custom_call.1} parent=1 // pred_check
      _
    $region7: #{tpu_custom_call.1} parent=1 // pred_check_branch
      %95 = sbr.rel (0) target = $region9
    $region8: #{tpu_custom_call.1} parent=1 // pred_region
      %s97 = ssub.s32 128, 128
      %98 = vsyncadd [#allocation6], %s97
      %s100 = sshll.u32 [#allocation5], 4
      %s101 = int_to_ptr.vmem [resolvable:$true] %s100
      %103 = dma.hbm_to_vmem [thread:$0]  %s3, 128, %s101, [#allocation6]
    $region9: #{tpu_custom_call.1} parent=1 // pred_fallthru
      _
    // Predicated region
    $region10: #{tpu_custom_call.1} parent=1 // pred_check
      _
    $region11: #{tpu_custom_call.1} parent=1 // pred_check_branch
      %105 = sbr.rel (0) target = $region13
    $region12: #{tpu_custom_call.1} parent=1 // pred_region
      %s107 = ssub.s32 2048, 2048
      %108 = vsyncadd [#allocation6], %s107
      %s109 = sshll.u32 [#allocation7], 4
      %s110 = int_to_ptr.vmem [resolvable:$true] %s109
      %115 = dma.hbm_to_vmem [thread:$0]  %s5, 2048, %s110, [#allocation6], 64, 64, 4
    $region13: #{tpu_custom_call.1} parent=1 // pred_fallthru
      _
    // Predicated region
    $region14: #{tpu_custom_call.1} parent=1 // pred_check
      _
    $region15: #{tpu_custom_call.1} parent=1 // pred_check_branch
      %117 = sbr.rel (0) target = $region17
    $region16: #{tpu_custom_call.1} parent=1 // pred_region
      %s119 = ssub.s32 2048, 2048
      %120 = vsyncadd [#allocation9], %s119
      %s121 = sshll.u32 [#allocation8], 4
      %s122 = int_to_ptr.vmem [resolvable:$true] %s121
      %127 = dma.hbm_to_vmem [thread:$0]  %s7, 2048, %s122, [#allocation9], 64, 64, 4
    $region17: #{tpu_custom_call.1} parent=1 // pred_fallthru
      _
    // Predicated region
    $region18: #{tpu_custom_call.1} parent=1 // pred_check
      _
    $region19: #{tpu_custom_call.1} parent=1 // pred_check_branch
      %129 = sbr.rel (0) target = $region21
    $region20: #{tpu_custom_call.1} parent=1 // pred_region
      %s131 = ssub.s32 16, 16
      %132 = vsyncadd [#allocation9], %s131
      %s134 = sshll.u32 [#allocation10], 4
      %s135 = int_to_ptr.vmem [resolvable:$true] %s134
      %137 = dma.hbm_to_vmem [thread:$0]  %s9, 16, %s135, [#allocation9]
    $region21: #{tpu_custom_call.1} parent=1 // pred_fallthru
      _
    // Predicated region
    $region22: #{tpu_custom_call.1} parent=1 // pred_check
      _
    $region23: #{tpu_custom_call.1} parent=1 // pred_check_branch
      %139 = sbr.rel (0) target = $region25
    $region24: #{tpu_custom_call.1} parent=1 // pred_region
      %s141 = ssub.s32 16, 16
      %142 = vsyncadd [#allocation12], %s141
      %s144 = sshll.u32 [#allocation11], 4
      %s145 = int_to_ptr.vmem [resolvable:$true] %s144
      %147 = dma.hbm_to_vmem [thread:$0]  %s11, 16, %s145, [#allocation12]
    $region25: #{tpu_custom_call.1} parent=1 // pred_fallthru
      _
    // Predicated region
    $region26: #{tpu_custom_call.1} parent=1 // pred_check
      _
    $region27: #{tpu_custom_call.1} parent=1 // pred_check_branch
      %149 = sbr.rel (0) target = $region29
    $region28: #{tpu_custom_call.1} parent=1 // pred_region
      %s151 = ssub.s32 1024, 1024
      %152 = vsyncadd [#allocation12], %s151
      %s153 = sshll.u32 [#allocation13], 4
      %s154 = int_to_ptr.vmem [resolvable:$true] %s153
      %159 = dma.hbm_to_vmem [thread:$0]  %s13, 1024, %s154, [#allocation12], 64, 64, 4
    $region29: #{tpu_custom_call.1} parent=1 // pred_fallthru
      _
    // Predicated region
    $region30: #{tpu_custom_call.1} parent=1 // pred_check
      _
    $region31: #{tpu_custom_call.1} parent=1 // pred_check_branch
      %161 = sbr.rel (0) target = $region33
    $region32: #{tpu_custom_call.1} parent=1 // pred_region
      %s163 = ssub.s32 16, 16
      %164 = vsyncadd [#allocation15], %s163
      %s166 = sshll.u32 [#allocation14], 4
      %s167 = int_to_ptr.vmem [resolvable:$true] %s166
      %169 = dma.hbm_to_vmem [thread:$0]  %s15, 16, %s167, [#allocation15]
    $region33: #{tpu_custom_call.1} parent=1 // pred_fallthru
      _
    // Predicated region
    $region34: #{tpu_custom_call.1} parent=1 // pred_check
      _
    $region35: #{tpu_custom_call.1} parent=1 // pred_check_branch
      %171 = sbr.rel (0) target = $region37
    $region36: #{tpu_custom_call.1} parent=1 // pred_region
      %s173 = ssub.s32 16, 16
      %174 = vsyncadd [#allocation15], %s173
      %s176 = sshll.u32 [#allocation16], 4
      %s177 = int_to_ptr.vmem [resolvable:$true] %s176
      %179 = dma.hbm_to_vmem [thread:$0]  %s17, 16, %s177, [#allocation15]
    $region37: #{tpu_custom_call.1} parent=1 // pred_fallthru
      _
    // Predicated region
    $region38: #{tpu_custom_call.1} parent=1 // pred_check
      _
    $region39: #{tpu_custom_call.1} parent=1 // pred_check_branch
      %181 = sbr.rel (0) target = $region41
    $region40: #{tpu_custom_call.1} parent=1 // pred_region
      %s183 = ssub.s32 1024, 1024
      %184 = vsyncadd [#allocation18], %s183
      %s185 = sshll.u32 [#allocation17], 4
      %s186 = int_to_ptr.vmem [resolvable:$true] %s185
      %191 = dma.hbm_to_vmem [thread:$0]  %s19, 1024, %s186, [#allocation18], 64, 64, 4
    $region41: #{tpu_custom_call.1} parent=1 // pred_fallthru
      _
    // Predicated region
    $region42: #{tpu_custom_call.1} parent=1 // pred_check
      _
    $region43: #{tpu_custom_call.1} parent=1 // pred_check_branch
      %193 = sbr.rel (0) target = $region45
    $region44: #{tpu_custom_call.1} parent=1 // pred_region
      %s195 = ssub.s32 16, 16
      %196 = vsyncadd [#allocation18], %s195
      %s198 = sshll.u32 [#allocation19], 4
      %s199 = int_to_ptr.vmem [resolvable:$true] %s198
      %201 = dma.hbm_to_vmem [thread:$0]  %s21, 16, %s199, [#allocation18]
    $region45: #{tpu_custom_call.1} parent=1 // pred_fallthru
      _
    // Predicated region
    $region46: #{tpu_custom_call.1} parent=1 // pred_check
      _
    $region47: #{tpu_custom_call.1} parent=1 // pred_check_branch
      %203 = sbr.rel (0) target = $region49
    $region48: #{tpu_custom_call.1} parent=1 // pred_region
      %s205 = ssub.s32 16, 16
      %206 = vsyncadd [#allocation21], %s205
      %s208 = sshll.u32 [#allocation20], 4
      %s209 = int_to_ptr.vmem [resolvable:$true] %s208
      %211 = dma.hbm_to_vmem [thread:$0]  %s23, 16, %s209, [#allocation21]
    $region49: #{tpu_custom_call.1} parent=1 // pred_fallthru
      _
    // Predicated region
    $region50: #{tpu_custom_call.1} parent=1 // pred_check
      _
    $region51: #{tpu_custom_call.1} parent=1 // pred_check_branch
      %213 = sbr.rel (0) target = $region53
    $region52: #{tpu_custom_call.1} parent=1 // pred_region
      %s215 = ssub.s32 1024, 1024
      %216 = vsyncadd [#allocation21], %s215
      %s217 = sshll.u32 [#allocation22], 4
      %s218 = int_to_ptr.vmem [resolvable:$true] %s217
      %223 = dma.hbm_to_vmem [thread:$0]  %s25, 1024, %s218, [#allocation21], 64, 64, 4
    $region53: #{tpu_custom_call.1} parent=1 // pred_fallthru
      _
    // Predicated region
    $region54: #{tpu_custom_call.1} parent=1 // pred_check
      _
    $region55: #{tpu_custom_call.1} parent=1 // pred_check_branch
      %225 = sbr.rel (0) target = $region57
    $region56: #{tpu_custom_call.1} parent=1 // pred_region
      %s227 = ssub.s32 16, 16
      %228 = vsyncadd [#allocation24], %s227
      %s230 = sshll.u32 [#allocation23], 4
      %s231 = int_to_ptr.vmem [resolvable:$true] %s230
      %233 = dma.hbm_to_vmem [thread:$0]  %s27, 16, %s231, [#allocation24]
    $region57: #{tpu_custom_call.1} parent=1 // pred_fallthru
      _
    // Predicated region
    $region58: #{tpu_custom_call.1} parent=1 // pred_check
      _
    $region59: #{tpu_custom_call.1} parent=1 // pred_check_branch
      %235 = sbr.rel (0) target = $region61
    $region60: #{tpu_custom_call.1} parent=1 // pred_region
      %s237 = ssub.s32 16, 16
      %238 = vsyncadd [#allocation24], %s237
      %s240 = sshll.u32 [#allocation25], 4
      %s241 = int_to_ptr.vmem [resolvable:$true] %s240
      %243 = dma.hbm_to_vmem [thread:$0]  %s29, 16, %s241, [#allocation24]
    $region61: #{tpu_custom_call.1} parent=1 // pred_fallthru
      _
    // Predicated region
    $region62: #{tpu_custom_call.1} parent=1 // pred_check
      _
    $region63: #{tpu_custom_call.1} parent=1 // pred_check_branch
      %245 = sbr.rel (0) target = $region65
    $region64: #{tpu_custom_call.1} parent=1 // pred_region
      %s247 = ssub.s32 16, 16
      %248 = vsyncadd [#allocation27], %s247
      %s250 = sshll.u32 [#allocation26], 4
      %s251 = int_to_ptr.vmem [resolvable:$true] %s250
      %253 = dma.hbm_to_vmem [thread:$0]  %s31, 16, %s251, [#allocation27]
    $region65: #{tpu_custom_call.1} parent=1 // pred_fallthru
      _
    // Predicated region
    $region66: #{tpu_custom_call.1} parent=1 // pred_check
      _
    $region67: #{tpu_custom_call.1} parent=1 // pred_check_branch
      %255 = sbr.rel (0) target = $region69
    $region68: #{tpu_custom_call.1} parent=1 // pred_region
      %s257 = ssub.s32 16, 16
      %258 = vsyncadd [#allocation27], %s257
      %s260 = sshll.u32 [#allocation28], 4
      %s261 = int_to_ptr.vmem [resolvable:$true] %s260
      %263 = dma.hbm_to_vmem [thread:$0]  %s33, 16, %s261, [#allocation27]
    $region69: #{tpu_custom_call.1} parent=1 // pred_fallthru
      _
    // Predicated region
    $region70: #{tpu_custom_call.1} parent=1 // pred_check
      _
    $region71: #{tpu_custom_call.1} parent=1 // pred_check_branch
      %265 = sbr.rel (0) target = $region73
    $region72: #{tpu_custom_call.1} parent=1 // pred_region
      _
    $region73: #{tpu_custom_call.1} parent=1 // pred_fallthru
      _
    // Predicated region
    $region74: #{tpu_custom_call.1} parent=1 // pred_check
      _
    $region75: #{tpu_custom_call.1} parent=1 // pred_check_branch
      %267 = sbr.rel (0) target = $region77
    $region76: #{tpu_custom_call.1} parent=1 // pred_region
      _
    $region77: #{tpu_custom_call.1} parent=1 // pred_fallthru
      _
    // Predicated region
    $region78: #{tpu_custom_call.1} parent=1 // pred_check
      _
    $region79: #{tpu_custom_call.1} parent=1 // pred_check_branch
      %269 = sbr.rel (0) target = $region81
    $region80: #{tpu_custom_call.1} parent=1 // pred_region
      _
    $region81: #{tpu_custom_call.1} parent=1 // pred_fallthru
      _
    // Predicated region
    $region82: #{tpu_custom_call.1} parent=1 // pred_check
      _
    $region83: #{tpu_custom_call.1} parent=1 // pred_check_branch
      %271 = sbr.rel (0) target = $region85
    $region84: #{tpu_custom_call.1} parent=1 // pred_region
      %s273 = ssub.s32 1024, 1024
      %274 = vsyncadd [#allocation30], %s273
      %s275 = sshll.u32 [#allocation29], 4
      %s276 = int_to_ptr.vmem [resolvable:$true] %s275
      %281 = dma.hbm_to_vmem [thread:$0]  %s41, 1024, %s276, [#allocation30], 64, 64, 4
    $region85: #{tpu_custom_call.1} parent=1 // pred_fallthru
      _
    // Predicated region
    $region86: #{tpu_custom_call.1} parent=1 // pred_check
      _
    $region87: #{tpu_custom_call.1} parent=1 // pred_check_branch
      %283 = sbr.rel (0) target = $region89
    $region88: #{tpu_custom_call.1} parent=1 // pred_region
      _
    $region89: #{tpu_custom_call.1} parent=1 // pred_fallthru
      _
    // Predicated region
    $region90: #{tpu_custom_call.1} parent=1 // pred_check
      _
    $region91: #{tpu_custom_call.1} parent=1 // pred_check_branch
      %285 = sbr.rel (0) target = $region93
    $region92: #{tpu_custom_call.1} parent=1 // pred_region
      %s287 = ssub.s32 1024, 1024
      %288 = vsyncadd [#allocation30], %s287
      %s289 = sshll.u32 [#allocation31], 4
      %s290 = int_to_ptr.vmem [resolvable:$true] %s289
      %295 = dma.hbm_to_vmem [thread:$0]  %s45, 1024, %s290, [#allocation30], 64, 64, 4
    $region93: #{tpu_custom_call.1} parent=1 // pred_fallthru
      _
    // Predicated region
    $region94: #{tpu_custom_call.1} parent=1 // pred_check
      _
    $region95: #{tpu_custom_call.1} parent=1 // pred_check_branch
      %297 = sbr.rel (0) target = $region97
    $region96: #{tpu_custom_call.1} parent=1 // pred_region
      _
    $region97: #{tpu_custom_call.1} parent=1 // pred_fallthru
      _
    // Predicated region
    $region98: #{tpu_custom_call.1} parent=1 // pred_check
      _
    $region99: #{tpu_custom_call.1} parent=1 // pred_check_branch
      %299 = sbr.rel (0) target = $region101
    $region100: #{tpu_custom_call.1} parent=1 // pred_region
      %300 = dma.done [#allocation3], 128
    $region101: #{tpu_custom_call.1} parent=1 // pred_fallthru
      _
    // Predicated region
    $region102: #{tpu_custom_call.1} parent=1 // pred_check
      _
    $region103: #{tpu_custom_call.1} parent=1 // pred_check_branch
      %302 = sbr.rel (0) target = $region105
    $region104: #{tpu_custom_call.1} parent=1 // pred_region
      %303 = dma.done [#allocation6], 128
    $region105: #{tpu_custom_call.1} parent=1 // pred_fallthru
      _
    // Predicated region
    $region106: #{tpu_custom_call.1} parent=1 // pred_check
      _
    $region107: #{tpu_custom_call.1} parent=1 // pred_check_branch
      %305 = sbr.rel (0) target = $region109
    $region108: #{tpu_custom_call.1} parent=1 // pred_region
      %306 = dma.done [#allocation6], 2048
    $region109: #{tpu_custom_call.1} parent=1 // pred_fallthru
      _
    // Predicated region
    $region110: #{tpu_custom_call.1} parent=1 // pred_check
      _
    $region111: #{tpu_custom_call.1} parent=1 // pred_check_branch
      %308 = sbr.rel (0) target = $region113
    $region112: #{tpu_custom_call.1} parent=1 // pred_region
      %309 = dma.done [#allocation9], 2048
    $region113: #{tpu_custom_call.1} parent=1 // pred_fallthru
      _
    // Predicated region
    $region114: #{tpu_custom_call.1} parent=1 // pred_check
      _
    $region115: #{tpu_custom_call.1} parent=1 // pred_check_branch
      %311 = sbr.rel (0) target = $region117
    $region116: #{tpu_custom_call.1} parent=1 // pred_region
      %312 = dma.done [#allocation9], 16
    $region117: #{tpu_custom_call.1} parent=1 // pred_fallthru
      _
    // Predicated region
    $region118: #{tpu_custom_call.1} parent=1 // pred_check
      _
    $region119: #{tpu_custom_call.1} parent=1 // pred_check_branch
      %314 = sbr.rel (0) target = $region121
    $region120: #{tpu_custom_call.1} parent=1 // pred_region
      %315 = dma.done [#allocation12], 16
    $region121: #{tpu_custom_call.1} parent=1 // pred_fallthru
      _
    // Predicated region
    $region122: #{tpu_custom_call.1} parent=1 // pred_check
      _
    $region123: #{tpu_custom_call.1} parent=1 // pred_check_branch
      %317 = sbr.rel (0) target = $region125
    $region124: #{tpu_custom_call.1} parent=1 // pred_region
      %318 = dma.done [#allocation12], 1024
    $region125: #{tpu_custom_call.1} parent=1 // pred_fallthru
      _
    // Predicated region
    $region126: #{tpu_custom_call.1} parent=1 // pred_check
      _
    $region127: #{tpu_custom_call.1} parent=1 // pred_check_branch
      %320 = sbr.rel (0) target = $region129
    $region128: #{tpu_custom_call.1} parent=1 // pred_region
      %321 = dma.done [#allocation15], 16
    $region129: #{tpu_custom_call.1} parent=1 // pred_fallthru
      _
    // Predicated region
    $region130: #{tpu_custom_call.1} parent=1 // pred_check
      _
    $region131: #{tpu_custom_call.1} parent=1 // pred_check_branch
      %323 = sbr.rel (0) target = $region133
    $region132: #{tpu_custom_call.1} parent=1 // pred_region
      %324 = dma.done [#allocation15], 16
    $region133: #{tpu_custom_call.1} parent=1 // pred_fallthru
      _
    // Predicated region
    $region134: #{tpu_custom_call.1} parent=1 // pred_check
      _
    $region135: #{tpu_custom_call.1} parent=1 // pred_check_branch
      %326 = sbr.rel (0) target = $region137
    $region136: #{tpu_custom_call.1} parent=1 // pred_region
      %327 = dma.done [#allocation18], 1024
    $region137: #{tpu_custom_call.1} parent=1 // pred_fallthru
      _
    // Predicated region
    $region138: #{tpu_custom_call.1} parent=1 // pred_check
      _
    $region139: #{tpu_custom_call.1} parent=1 // pred_check_branch
      %329 = sbr.rel (0) target = $region141
    $region140: #{tpu_custom_call.1} parent=1 // pred_region
      %330 = dma.done [#allocation18], 16
    $region141: #{tpu_custom_call.1} parent=1 // pred_fallthru
      _
    // Predicated region
    $region142: #{tpu_custom_call.1} parent=1 // pred_check
      _
    $region143: #{tpu_custom_call.1} parent=1 // pred_check_branch
      %332 = sbr.rel (0) target = $region145
    $region144: #{tpu_custom_call.1} parent=1 // pred_region
      %333 = dma.done [#allocation21], 16
    $region145: #{tpu_custom_call.1} parent=1 // pred_fallthru
      _
    // Predicated region
    $region146: #{tpu_custom_call.1} parent=1 // pred_check
      _
    $region147: #{tpu_custom_call.1} parent=1 // pred_check_branch
      %335 = sbr.rel (0) target = $region149
    $region148: #{tpu_custom_call.1} parent=1 // pred_region
      %336 = dma.done [#allocation21], 1024
    $region149: #{tpu_custom_call.1} parent=1 // pred_fallthru
      _
    // Predicated region
    $region150: #{tpu_custom_call.1} parent=1 // pred_check
      _
    $region151: #{tpu_custom_call.1} parent=1 // pred_check_branch
      %338 = sbr.rel (0) target = $region153
    $region152: #{tpu_custom_call.1} parent=1 // pred_region
      %339 = dma.done [#allocation24], 16
    $region153: #{tpu_custom_call.1} parent=1 // pred_fallthru
      _
    // Predicated region
    $region154: #{tpu_custom_call.1} parent=1 // pred_check
      _
    $region155: #{tpu_custom_call.1} parent=1 // pred_check_branch
      %341 = sbr.rel (0) target = $region157
    $region156: #{tpu_custom_call.1} parent=1 // pred_region
      %342 = dma.done [#allocation24], 16
    $region157: #{tpu_custom_call.1} parent=1 // pred_fallthru
      _
    // Predicated region
    $region158: #{tpu_custom_call.1} parent=1 // pred_check
      _
    $region159: #{tpu_custom_call.1} parent=1 // pred_check_branch
      %344 = sbr.rel (0) target = $region161
    $region160: #{tpu_custom_call.1} parent=1 // pred_region
      %345 = dma.done [#allocation27], 16
    $region161: #{tpu_custom_call.1} parent=1 // pred_fallthru
      _
    // Predicated region
    $region162: #{tpu_custom_call.1} parent=1 // pred_check
      _
    $region163: #{tpu_custom_call.1} parent=1 // pred_check_branch
      %347 = sbr.rel (0) target = $region165
    $region164: #{tpu_custom_call.1} parent=1 // pred_region
      %348 = dma.done [#allocation27], 16
    $region165: #{tpu_custom_call.1} parent=1 // pred_fallthru
      _
    // Predicated region
    $region166: #{tpu_custom_call.1} parent=1 // pred_check
      _
    $region167: #{tpu_custom_call.1} parent=1 // pred_check_branch
      %350 = sbr.rel (0) target = $region169
    $region168: #{tpu_custom_call.1} parent=1 // pred_region
      %351 = dma.done [#allocation30], 1024
    $region169: #{tpu_custom_call.1} parent=1 // pred_fallthru
      _
    // Predicated region
    $region170: #{tpu_custom_call.1} parent=1 // pred_check
      _
    $region171: #{tpu_custom_call.1} parent=1 // pred_check_branch
      %353 = sbr.rel (0) target = $region173
    $region172: #{tpu_custom_call.1} parent=1 // pred_region
      %354 = dma.done [#allocation30], 1024
    $region173: #{tpu_custom_call.1} parent=1 // pred_fallthru
      _
    %v356 = vld [vmem:[#allocation2] sm:$0xff]
    %v357 = vld [vmem:[#allocation7] sm:$0xf]
    %v358 = vld [vmem:[#allocation7 + $0x4] sm:$0xf]
    %v359 = vld [vmem:[#allocation7 + $0x8] sm:$0xf]
    %v360 = vld [vmem:[#allocation7 + $0xc] sm:$0xf]
    %v361 = vld [vmem:[#allocation7 + $0x10] sm:$0xf]
    %v362 = vld [vmem:[#allocation7 + $0x14] sm:$0xf]
    %v363 = vld [vmem:[#allocation7 + $0x18] sm:$0xf]
    %v364 = vld [vmem:[#allocation7 + $0x1c] sm:$0xf]
    %v365 = vld [vmem:[#allocation7 + $0x20] sm:$0xf]
    %v366 = vld [vmem:[#allocation7 + $0x24] sm:$0xf]
    %v367 = vld [vmem:[#allocation7 + $0x28] sm:$0xf]
    %v368 = vld [vmem:[#allocation7 + $0x2c] sm:$0xf]
    %v369 = vld [vmem:[#allocation7 + $0x30] sm:$0xf]
    %v370 = vld [vmem:[#allocation7 + $0x34] sm:$0xf]
    %v371 = vld [vmem:[#allocation7 + $0x38] sm:$0xf]
    %v372 = vld [vmem:[#allocation7 + $0x3c] sm:$0xf]
    %v373 = vld [vmem:[#allocation7 + $0x40] sm:$0xf]
    %v374 = vld [vmem:[#allocation7 + $0x44] sm:$0xf]
    %v375 = vld [vmem:[#allocation7 + $0x48] sm:$0xf]
    %v376 = vld [vmem:[#allocation7 + $0x4c] sm:$0xf]
    %v377 = vld [vmem:[#allocation7 + $0x50] sm:$0xf]
    %v378 = vld [vmem:[#allocation7 + $0x54] sm:$0xf]
    %v379 = vld [vmem:[#allocation7 + $0x58] sm:$0xf]
    %v380 = vld [vmem:[#allocation7 + $0x5c] sm:$0xf]
    %v381 = vld [vmem:[#allocation7 + $0x60] sm:$0xf]
    %v382 = vld [vmem:[#allocation7 + $0x64] sm:$0xf]
    %v383 = vld [vmem:[#allocation7 + $0x68] sm:$0xf]
    %v384 = vld [vmem:[#allocation7 + $0x6c] sm:$0xf]
    %v385 = vld [vmem:[#allocation7 + $0x70] sm:$0xf]
    %v386 = vld [vmem:[#allocation7 + $0x74] sm:$0xf]
    %v387 = vld [vmem:[#allocation7 + $0x78] sm:$0xf]
    %v388 = vld [vmem:[#allocation7 + $0x7c] sm:$0xf]
    %v390 = vunpack.c.l.b16 %v356
    %v391 = vunpack.c.h.b16 %v356
    %v392 = vpack.c.b16 %v390, %v390
    %v393 = vpack.c.b16 %v391, %v391
    %v428 = vunpack.c.l.b16 %v357
    %v429 = vunpack.c.l.b16 %v358
    %v430 = vunpack.c.l.b16 %v359
    %v431 = vunpack.c.l.b16 %v360
    %v432 = vunpack.c.l.b16 %v361
    %v433 = vunpack.c.l.b16 %v362
    %v434 = vunpack.c.l.b16 %v363
    %v435 = vunpack.c.l.b16 %v364
    %v436 = vunpack.c.l.b16 %v365
    %v437 = vunpack.c.l.b16 %v366
    %v438 = vunpack.c.l.b16 %v367
    %v439 = vunpack.c.l.b16 %v368
    %v440 = vunpack.c.l.b16 %v369
    %v441 = vunpack.c.l.b16 %v370
    %v442 = vunpack.c.l.b16 %v371
    %v443 = vunpack.c.l.b16 %v372
    %v444 = vunpack.c.l.b16 %v373
    %v445 = vunpack.c.l.b16 %v374
    %v446 = vunpack.c.l.b16 %v375
    %v447 = vunpack.c.l.b16 %v376
    %v448 = vunpack.c.l.b16 %v377
    %v449 = vunpack.c.l.b16 %v378
    %v450 = vunpack.c.l.b16 %v379
    %v451 = vunpack.c.l.b16 %v380
    %v452 = vunpack.c.l.b16 %v381
    %v453 = vunpack.c.l.b16 %v382
    %v454 = vunpack.c.l.b16 %v383
    %v455 = vunpack.c.l.b16 %v384
    %v456 = vunpack.c.l.b16 %v385
    %v457 = vunpack.c.l.b16 %v386
    %v458 = vunpack.c.l.b16 %v387
    %v459 = vunpack.c.l.b16 %v388
    %v460 = vpack.c.b16 %v429, %v428
    %v461 = vpack.c.b16 %v431, %v430
    %v462 = vpack.c.b16 %v433, %v432
    %v463 = vpack.c.b16 %v435, %v434
    %v464 = vpack.c.b16 %v437, %v436
    %v465 = vpack.c.b16 %v439, %v438
    %v466 = vpack.c.b16 %v441, %v440
    %v467 = vpack.c.b16 %v443, %v442
    %v468 = vpack.c.b16 %v445, %v444
    %v469 = vpack.c.b16 %v447, %v446
    %v470 = vpack.c.b16 %v449, %v448
    %v471 = vpack.c.b16 %v451, %v450
    %v472 = vpack.c.b16 %v453, %v452
    %v473 = vpack.c.b16 %v455, %v454
    %v474 = vpack.c.b16 %v457, %v456
    %v475 = vpack.c.b16 %v459, %v458
    %492 = vmatprep.subr.bf16.mxu0 0
    %493 = vmatpush1.bf16.msra.mxu0 %v460
    %494 = vmatprep.subr.bf16.mxu0 0
    %495 = vmatpush1.bf16.msra.mxu0 %v461
    %496 = vmatprep.subr.bf16.mxu0 0
    %497 = vmatpush1.bf16.msra.mxu0 %v462
    %498 = vmatprep.subr.bf16.mxu0 0
    %499 = vmatpush1.bf16.msra.mxu0 %v463
    %500 = vmatprep.subr.bf16.mxu0 0
    %501 = vmatpush1.bf16.msra.mxu0 %v464
    %502 = vmatprep.subr.bf16.mxu0 0
    %503 = vmatpush1.bf16.msra.mxu0 %v465
    %504 = vmatprep.subr.bf16.mxu0 0
    %505 = vmatpush1.bf16.msra.mxu0 %v466
    %506 = vmatprep.subr.bf16.mxu0 0
    %507 = vmatpush1.bf16.msra.mxu0 %v467
    %508 = vmatprep.subr.bf16.mxu0 0
    %509 = vmatpush1.bf16.msra.mxu0 %v468
    %510 = vmatprep.subr.bf16.mxu0 0
    %511 = vmatpush1.bf16.msra.mxu0 %v469
    %512 = vmatprep.subr.bf16.mxu0 0
    %513 = vmatpush1.bf16.msra.mxu0 %v470
    %514 = vmatprep.subr.bf16.mxu0 0
    %515 = vmatpush1.bf16.msra.mxu0 %v471
    %516 = vmatprep.subr.bf16.mxu0 0
    %517 = vmatpush1.bf16.msra.mxu0 %v472
    %518 = vmatprep.subr.bf16.mxu0 0
    %519 = vmatpush1.bf16.msra.mxu0 %v473
    %520 = vmatprep.subr.bf16.mxu0 0
    %521 = vmatpush1.bf16.msra.mxu0 %v474
    %522 = vmatprep.subr.bf16.mxu0 0
    %523 = vmatpush1.bf16.msra.mxu0 %v475
    %524 = vmatprep.mubr.bf16.mxu0 %v393
    %525 = vmatmul.mubr.bf16.gmra.mrb[0].mxu0 %v392
    %v526 = vpop.f32.mrb[0].mxu0
    %v527 = vadd.f32 0.0, %v526
    %v528 = vpop.f32.mrb[0].mxu0
    %v529 = vpop.f32.mrb[0].mxu0
    %v530 = vpop.f32.mrb[0].mxu0
    %531 = vdwg.mxu0
    %v532 = vld [vmem:[#allocation5] sm:$0xff]
    %v533 = vld [vmem:[#allocation8] sm:$0xf]
    %v534 = vld [vmem:[#allocation8 + $0x4] sm:$0xf]
    %v535 = vld [vmem:[#allocation8 + $0x8] sm:$0xf]
    %v536 = vld [vmem:[#allocation8 + $0xc] sm:$0xf]
    %v537 = vld [vmem:[#allocation8 + $0x10] sm:$0xf]
    %v538 = vld [vmem:[#allocation8 + $0x14] sm:$0xf]
    %v539 = vld [vmem:[#allocation8 + $0x18] sm:$0xf]
    %v540 = vld [vmem:[#allocation8 + $0x1c] sm:$0xf]
    %v541 = vld [vmem:[#allocation8 + $0x20] sm:$0xf]
    %v542 = vld [vmem:[#allocation8 + $0x24] sm:$0xf]
    %v543 = vld [vmem:[#allocation8 + $0x28] sm:$0xf]
    %v544 = vld [vmem:[#allocation8 + $0x2c] sm:$0xf]
    %v545 = vld [vmem:[#allocation8 + $0x30] sm:$0xf]
    %v546 = vld [vmem:[#allocation8 + $0x34] sm:$0xf]
    %v547 = vld [vmem:[#allocation8 + $0x38] sm:$0xf]
    %v548 = vld [vmem:[#allocation8 + $0x3c] sm:$0xf]
    %v549 = vld [vmem:[#allocation8 + $0x40] sm:$0xf]
    %v550 = vld [vmem:[#allocation8 + $0x44] sm:$0xf]
    %v551 = vld [vmem:[#allocation8 + $0x48] sm:$0xf]
    %v552 = vld [vmem:[#allocation8 + $0x4c] sm:$0xf]
    %v553 = vld [vmem:[#allocation8 + $0x50] sm:$0xf]
    %v554 = vld [vmem:[#allocation8 + $0x54] sm:$0xf]
    %v555 = vld [vmem:[#allocation8 + $0x58] sm:$0xf]
    %v556 = vld [vmem:[#allocation8 + $0x5c] sm:$0xf]
    %v557 = vld [vmem:[#allocation8 + $0x60] sm:$0xf]
    %v558 = vld [vmem:[#allocation8 + $0x64] sm:$0xf]
    %v559 = vld [vmem:[#allocation8 + $0x68] sm:$0xf]
    %v560 = vld [vmem:[#allocation8 + $0x6c] sm:$0xf]
    %v561 = vld [vmem:[#allocation8 + $0x70] sm:$0xf]
    %v562 = vld [vmem:[#allocation8 + $0x74] sm:$0xf]
    %v563 = vld [vmem:[#allocation8 + $0x78] sm:$0xf]
    %v564 = vld [vmem:[#allocation8 + $0x7c] sm:$0xf]
    %v566 = vunpack.c.l.b16 %v532
    %v567 = vunpack.c.h.b16 %v532
    %v568 = vpack.c.b16 %v566, %v566
    %v569 = vpack.c.b16 %v567, %v567
    %v604 = vunpack.c.l.b16 %v533
    %v605 = vunpack.c.l.b16 %v534
    %v606 = vunpack.c.l.b16 %v535
    %v607 = vunpack.c.l.b16 %v536
    %v608 = vunpack.c.l.b16 %v537
    %v609 = vunpack.c.l.b16 %v538
    %v610 = vunpack.c.l.b16 %v539
    %v611 = vunpack.c.l.b16 %v540
    %v612 = vunpack.c.l.b16 %v541
    %v613 = vunpack.c.l.b16 %v542
    %v614 = vunpack.c.l.b16 %v543
    %v615 = vunpack.c.l.b16 %v544
    %v616 = vunpack.c.l.b16 %v545
    %v617 = vunpack.c.l.b16 %v546
    %v618 = vunpack.c.l.b16 %v547
    %v619 = vunpack.c.l.b16 %v548
    %v620 = vunpack.c.l.b16 %v549
    %v621 = vunpack.c.l.b16 %v550
    %v622 = vunpack.c.l.b16 %v551
    %v623 = vunpack.c.l.b16 %v552
    %v624 = vunpack.c.l.b16 %v553
    %v625 = vunpack.c.l.b16 %v554
    %v626 = vunpack.c.l.b16 %v555
    %v627 = vunpack.c.l.b16 %v556
    %v628 = vunpack.c.l.b16 %v557
    %v629 = vunpack.c.l.b16 %v558
    %v630 = vunpack.c.l.b16 %v559
    %v631 = vunpack.c.l.b16 %v560
    %v632 = vunpack.c.l.b16 %v561
    %v633 = vunpack.c.l.b16 %v562
    %v634 = vunpack.c.l.b16 %v563
    %v635 = vunpack.c.l.b16 %v564
    %v636 = vpack.c.b16 %v605, %v604
    %v637 = vpack.c.b16 %v607, %v606
    %v638 = vpack.c.b16 %v609, %v608
    %v639 = vpack.c.b16 %v611, %v610
    %v640 = vpack.c.b16 %v613, %v612
    %v641 = vpack.c.b16 %v615, %v614
    %v642 = vpack.c.b16 %v617, %v616
    %v643 = vpack.c.b16 %v619, %v618
    %v644 = vpack.c.b16 %v621, %v620
    %v645 = vpack.c.b16 %v623, %v622
    %v646 = vpack.c.b16 %v625, %v624
    %v647 = vpack.c.b16 %v627, %v626
    %v648 = vpack.c.b16 %v629, %v628
    %v649 = vpack.c.b16 %v631, %v630
    %v650 = vpack.c.b16 %v633, %v632
    %v651 = vpack.c.b16 %v635, %v634
    %668 = vmatprep.subr.bf16.mxu0 0
    %669 = vmatpush1.bf16.msra.mxu0 %v636
    %670 = vmatprep.subr.bf16.mxu0 0
    %671 = vmatpush1.bf16.msra.mxu0 %v637
    %672 = vmatprep.subr.bf16.mxu0 0
    %673 = vmatpush1.bf16.msra.mxu0 %v638
    %674 = vmatprep.subr.bf16.mxu0 0
    %675 = vmatpush1.bf16.msra.mxu0 %v639
    %676 = vmatprep.subr.bf16.mxu0 0
    %677 = vmatpush1.bf16.msra.mxu0 %v640
    %678 = vmatprep.subr.bf16.mxu0 0
    %679 = vmatpush1.bf16.msra.mxu0 %v641
    %680 = vmatprep.subr.bf16.mxu0 0
    %681 = vmatpush1.bf16.msra.mxu0 %v642
    %682 = vmatprep.subr.bf16.mxu0 0
    %683 = vmatpush1.bf16.msra.mxu0 %v643
    %684 = vmatprep.subr.bf16.mxu0 0
    %685 = vmatpush1.bf16.msra.mxu0 %v644
    %686 = vmatprep.subr.bf16.mxu0 0
    %687 = vmatpush1.bf16.msra.mxu0 %v645
    %688 = vmatprep.subr.bf16.mxu0 0
    %689 = vmatpush1.bf16.msra.mxu0 %v646
    %690 = vmatprep.subr.bf16.mxu0 0
    %691 = vmatpush1.bf16.msra.mxu0 %v647
    %692 = vmatprep.subr.bf16.mxu0 0
    %693 = vmatpush1.bf16.msra.mxu0 %v648
    %694 = vmatprep.subr.bf16.mxu0 0
    %695 = vmatpush1.bf16.msra.mxu0 %v649
    %696 = vmatprep.subr.bf16.mxu0 0
    %697 = vmatpush1.bf16.msra.mxu0 %v650
    %698 = vmatprep.subr.bf16.mxu0 0
    %699 = vmatpush1.bf16.msra.mxu0 %v651
    %700 = vmatprep.mubr.bf16.mxu0 %v569
    %701 = vmatmul.mubr.bf16.gmra.mrb[0].mxu0 %v568
    %v702 = vpop.f32.mrb[0].mxu0
    %v703 = vadd.f32 0.0, %v702
    %v704 = vpop.f32.mrb[0].mxu0
    %v705 = vpop.f32.mrb[0].mxu0
    %v706 = vpop.f32.mrb[0].mxu0
    %707 = vdwg.mxu0
    %v708 = vrot.slane %v527, 4
    %v709 = vadd.f32 %v527, %v708
    %v710 = vrot.slane %v709, 2
    %v711 = vadd.f32 %v709, %v710
    %v712 = vrot.slane %v711, 1
    %v713 = vadd.f32 %v711, %v712
    %v714 = vrcp.pop 8.0
    %v715 = vmul.f32 %v713, %v714
    %v716 = vsub.f32 %v527, %v715
    %v717 = vmul.f32 %v716, %v716
    %v718 = vrot.slane %v717, 4
    %v719 = vadd.f32 %v717, %v718
    %v720 = vrot.slane %v719, 2
    %v721 = vadd.f32 %v719, %v720
    %v722 = vrot.slane %v721, 1
    %v723 = vadd.f32 %v721, %v722
    %v724 = vmul.f32 %v723, %v714
    %v725 = vld [vmem:[#allocation10] sm:$0x1]
    %v726 = vadd.f32 %v724, 1e-05
    %v727 = vrsqrt.pop %v726
    %v728 = vmul.f32 %v725, %v727
    %v729 = vld [vmem:[#allocation11] sm:$0x1]
    %v730 = vmul.f32 %v715, %v728
    %v731 = vsub.f32 %v729, %v730
    %v733 = vlaneseq
    %v734 = vshrl.u32 %v733, 7
    %v735 = vsub.s32 0, %v734
    %v736 = vrot.slane %v728, %v735
    %v738 = vmul.f32 %v527, %v736
    %v740 = vlaneseq
    %v741 = vshrl.u32 %v740, 7
    %v742 = vsub.s32 0, %v741
    %v743 = vrot.slane %v731, %v742
    %v745 = vadd.f32 %v738, %v743
    %v746 = vmax.f32 %v745, 0.0
    %v747 = vrot.slane %v703, 4
    %v748 = vadd.f32 %v703, %v747
    %v749 = vrot.slane %v748, 2
    %v750 = vadd.f32 %v748, %v749
    %v751 = vrot.slane %v750, 1
    %v752 = vadd.f32 %v750, %v751
    %v753 = vmul.f32 %v752, %v714
    %v754 = vsub.f32 %v703, %v753
    %v755 = vmul.f32 %v754, %v754
    %v756 = vrot.slane %v755, 4
    %v757 = vadd.f32 %v755, %v756
    %v758 = vrot.slane %v757, 2
    %v759 = vadd.f32 %v757, %v758
    %v760 = vrot.slane %v759, 1
    %v761 = vadd.f32 %v759, %v760
    %v762 = vmul.f32 %v761, %v714
    %v763 = vld [vmem:[#allocation26] sm:$0x1]
    %v764 = vadd.f32 %v762, 1e-05
    %v765 = vrsqrt.pop %v764
    %v766 = vmul.f32 %v763, %v765
    %v767 = vld [vmem:[#allocation28] sm:$0x1]
    %v768 = vmul.f32 %v753, %v766
    %v769 = vsub.f32 %v767, %v768
    %v771 = vlaneseq
    %v772 = vshrl.u32 %v771, 7
    %v773 = vsub.s32 0, %v772
    %v774 = vrot.slane %v766, %v773
    %v776 = vmul.f32 %v703, %v774
    %v778 = vlaneseq
    %v779 = vshrl.u32 %v778, 7
    %v780 = vsub.s32 0, %v779
    %v781 = vrot.slane %v769, %v780
    %v783 = vadd.f32 %v776, %v781
    %v784 = vmax.f32 %v783, 0.0
    %v785 = vpack.c.bf16 %v746, %v746
    %v786 = vld [vmem:[#allocation13] sm:$0xf]
    %v787 = vld [vmem:[#allocation13 + $0x4] sm:$0xf]
    %v788 = vld [vmem:[#allocation13 + $0x8] sm:$0xf]
    %v789 = vld [vmem:[#allocation13 + $0xc] sm:$0xf]
    %v790 = vld [vmem:[#allocation13 + $0x10] sm:$0xf]
    %v791 = vld [vmem:[#allocation13 + $0x14] sm:$0xf]
    %v792 = vld [vmem:[#allocation13 + $0x18] sm:$0xf]
    %v793 = vld [vmem:[#allocation13 + $0x1c] sm:$0xf]
    %v794 = vld [vmem:[#allocation13 + $0x20] sm:$0xf]
    %v795 = vld [vmem:[#allocation13 + $0x24] sm:$0xf]
    %v796 = vld [vmem:[#allocation13 + $0x28] sm:$0xf]
    %v797 = vld [vmem:[#allocation13 + $0x2c] sm:$0xf]
    %v798 = vld [vmem:[#allocation13 + $0x30] sm:$0xf]
    %v799 = vld [vmem:[#allocation13 + $0x34] sm:$0xf]
    %v800 = vld [vmem:[#allocation13 + $0x38] sm:$0xf]
    %v801 = vld [vmem:[#allocation13 + $0x3c] sm:$0xf]
    %v818 = vunpack.c.l.b16 %v786
    %v819 = vunpack.c.l.b16 %v787
    %v820 = vunpack.c.l.b16 %v788
    %v821 = vunpack.c.l.b16 %v789
    %v822 = vunpack.c.l.b16 %v790
    %v823 = vunpack.c.l.b16 %v791
    %v824 = vunpack.c.l.b16 %v792
    %v825 = vunpack.c.l.b16 %v793
    %v826 = vunpack.c.l.b16 %v794
    %v827 = vunpack.c.l.b16 %v795
    %v828 = vunpack.c.l.b16 %v796
    %v829 = vunpack.c.l.b16 %v797
    %v830 = vunpack.c.l.b16 %v798
    %v831 = vunpack.c.l.b16 %v799
    %v832 = vunpack.c.l.b16 %v800
    %v833 = vunpack.c.l.b16 %v801
    %v834 = vpack.c.b16 %v819, %v818
    %v835 = vpack.c.b16 %v821, %v820
    %v836 = vpack.c.b16 %v823, %v822
    %v837 = vpack.c.b16 %v825, %v824
    %v838 = vpack.c.b16 %v827, %v826
    %v839 = vpack.c.b16 %v829, %v828
    %v840 = vpack.c.b16 %v831, %v830
    %v841 = vpack.c.b16 %v833, %v832
    %850 = vmatprep.subr.bf16.mxu0 0
    %851 = vmatpush1.bf16.msra.mxu0 %v834
    %852 = vmatprep.subr.bf16.mxu0 0
    %853 = vmatpush1.bf16.msra.mxu0 %v835
    %854 = vmatprep.subr.bf16.mxu0 0
    %855 = vmatpush1.bf16.msra.mxu0 %v836
    %856 = vmatprep.subr.bf16.mxu0 0
    %857 = vmatpush1.bf16.msra.mxu0 %v837
    %858 = vmatprep.subr.bf16.mxu0 0
    %859 = vmatpush1.bf16.msra.mxu0 %v838
    %860 = vmatprep.subr.bf16.mxu0 0
    %861 = vmatpush1.bf16.msra.mxu0 %v839
    %862 = vmatprep.subr.bf16.mxu0 0
    %863 = vmatpush1.bf16.msra.mxu0 %v840
    %864 = vmatprep.subr.bf16.mxu0 0
    %865 = vmatpush1.bf16.msra.mxu0 %v841
    %866 = vmatprep.subr.bf16.mxu0 0
    %867 = vmatpush1.bf16.msra.mxu0 0
    %868 = vmatprep.subr.bf16.mxu0 0
    %869 = vmatpush1.bf16.msra.mxu0 0
    %870 = vmatprep.subr.bf16.mxu0 0
    %871 = vmatpush1.bf16.msra.mxu0 0
    %872 = vmatprep.subr.bf16.mxu0 0
    %873 = vmatpush1.bf16.msra.mxu0 0
    %874 = vmatprep.subr.bf16.mxu0 0
    %875 = vmatpush1.bf16.msra.mxu0 0
    %876 = vmatprep.subr.bf16.mxu0 0
    %877 = vmatpush1.bf16.msra.mxu0 0
    %878 = vmatprep.subr.bf16.mxu0 0
    %879 = vmatpush1.bf16.msra.mxu0 0
    %880 = vmatprep.subr.bf16.mxu0 0
    %881 = vmatpush1.bf16.msra.mxu0 0
    %882 = vmatprep.mubr.bf16.mxu0 0
    %883 = vmatmul.mubr.bf16.gmra.mrb[0].mxu0 %v785
    %v884 = vpop.f32.mrb[0].mxu0
    %v885 = vadd.f32 0.0, %v884
    %v886 = vpop.f32.mrb[0].mxu0
    %v887 = vpop.f32.mrb[0].mxu0
    %v888 = vpop.f32.mrb[0].mxu0
    %889 = vdwg.mxu0
    %v890 = vrot.slane %v885, 4
    %v891 = vadd.f32 %v885, %v890
    %v892 = vrot.slane %v891, 2
    %v893 = vadd.f32 %v891, %v892
    %v894 = vrot.slane %v893, 1
    %v895 = vadd.f32 %v893, %v894
    %v896 = vmul.f32 %v895, %v714
    %v897 = vsub.f32 %v885, %v896
    %v898 = vmul.f32 %v897, %v897
    %v899 = vrot.slane %v898, 4
    %v900 = vadd.f32 %v898, %v899
    %v901 = vrot.slane %v900, 2
    %v902 = vadd.f32 %v900, %v901
    %v903 = vrot.slane %v902, 1
    %v904 = vadd.f32 %v902, %v903
    %v905 = vmul.f32 %v904, %v714
    %v906 = vld [vmem:[#allocation14] sm:$0x1]
    %v907 = vadd.f32 %v905, 1e-05
    %v908 = vrsqrt.pop %v907
    %v909 = vmul.f32 %v906, %v908
    %v910 = vld [vmem:[#allocation16] sm:$0x1]
    %v911 = vmul.f32 %v896, %v909
    %v912 = vsub.f32 %v910, %v911
    %v914 = vlaneseq
    %v915 = vshrl.u32 %v914, 7
    %v916 = vsub.s32 0, %v915
    %v917 = vrot.slane %v909, %v916
    %v919 = vmul.f32 %v885, %v917
    %v921 = vlaneseq
    %v922 = vshrl.u32 %v921, 7
    %v923 = vsub.s32 0, %v922
    %v924 = vrot.slane %v912, %v923
    %v926 = vadd.f32 %v919, %v924
    %v927 = vmax.f32 %v926, 0.0
    %v928 = vpack.c.bf16 %v784, %v784
    %v929 = vld [vmem:[%s35] sm:$0xf]
    %v930 = vld [vmem:[%s35 + $0x4] sm:$0xf]
    %v931 = vld [vmem:[%s35 + $0x8] sm:$0xf]
    %v932 = vld [vmem:[%s35 + $0xc] sm:$0xf]
    %v933 = vld [vmem:[%s35 + $0x10] sm:$0xf]
    %v934 = vld [vmem:[%s35 + $0x14] sm:$0xf]
    %v935 = vld [vmem:[%s35 + $0x18] sm:$0xf]
    %v936 = vld [vmem:[%s35 + $0x1c] sm:$0xf]
    %v937 = vld [vmem:[%s35 + $0x20] sm:$0xf]
    %v938 = vld [vmem:[%s35 + $0x24] sm:$0xf]
    %v939 = vld [vmem:[%s35 + $0x28] sm:$0xf]
    %v940 = vld [vmem:[%s35 + $0x2c] sm:$0xf]
    %v941 = vld [vmem:[%s35 + $0x30] sm:$0xf]
    %v942 = vld [vmem:[%s35 + $0x34] sm:$0xf]
    %v943 = vld [vmem:[%s35 + $0x38] sm:$0xf]
    %v944 = vld [vmem:[%s35 + $0x3c] sm:$0xf]
    %v961 = vunpack.c.l.b16 %v929
    %v962 = vunpack.c.l.b16 %v930
    %v963 = vunpack.c.l.b16 %v931
    %v964 = vunpack.c.l.b16 %v932
    %v965 = vunpack.c.l.b16 %v933
    %v966 = vunpack.c.l.b16 %v934
    %v967 = vunpack.c.l.b16 %v935
    %v968 = vunpack.c.l.b16 %v936
    %v969 = vunpack.c.l.b16 %v937
    %v970 = vunpack.c.l.b16 %v938
    %v971 = vunpack.c.l.b16 %v939
    %v972 = vunpack.c.l.b16 %v940
    %v973 = vunpack.c.l.b16 %v941
    %v974 = vunpack.c.l.b16 %v942
    %v975 = vunpack.c.l.b16 %v943
    %v976 = vunpack.c.l.b16 %v944
    %v977 = vpack.c.b16 %v962, %v961
    %v978 = vpack.c.b16 %v964, %v963
    %v979 = vpack.c.b16 %v966, %v965
    %v980 = vpack.c.b16 %v968, %v967
    %v981 = vpack.c.b16 %v970, %v969
    %v982 = vpack.c.b16 %v972, %v971
    %v983 = vpack.c.b16 %v974, %v973
    %v984 = vpack.c.b16 %v976, %v975
    %993 = vmatprep.subr.bf16.mxu0 0
    %994 = vmatpush1.bf16.msra.mxu0 %v977
    %995 = vmatprep.subr.bf16.mxu0 0
    %996 = vmatpush1.bf16.msra.mxu0 %v978
    %997 = vmatprep.subr.bf16.mxu0 0
    %998 = vmatpush1.bf16.msra.mxu0 %v979
    %999 = vmatprep.subr.bf16.mxu0 0
    %1000 = vmatpush1.bf16.msra.mxu0 %v980
    %1001 = vmatprep.subr.bf16.mxu0 0
    %1002 = vmatpush1.bf16.msra.mxu0 %v981
    %1003 = vmatprep.subr.bf16.mxu0 0
    %1004 = vmatpush1.bf16.msra.mxu0 %v982
    %1005 = vmatprep.subr.bf16.mxu0 0
    %1006 = vmatpush1.bf16.msra.mxu0 %v983
    %1007 = vmatprep.subr.bf16.mxu0 0
    %1008 = vmatpush1.bf16.msra.mxu0 %v984
    %1009 = vmatprep.subr.bf16.mxu0 0
    %1010 = vmatpush1.bf16.msra.mxu0 0
    %1011 = vmatprep.subr.bf16.mxu0 0
    %1012 = vmatpush1.bf16.msra.mxu0 0
    %1013 = vmatprep.subr.bf16.mxu0 0
    %1014 = vmatpush1.bf16.msra.mxu0 0
    %1015 = vmatprep.subr.bf16.mxu0 0
    %1016 = vmatpush1.bf16.msra.mxu0 0
    %1017 = vmatprep.subr.bf16.mxu0 0
    %1018 = vmatpush1.bf16.msra.mxu0 0
    %1019 = vmatprep.subr.bf16.mxu0 0
    %1020 = vmatpush1.bf16.msra.mxu0 0
    %1021 = vmatprep.subr.bf16.mxu0 0
    %1022 = vmatpush1.bf16.msra.mxu0 0
    %1023 = vmatprep.subr.bf16.mxu0 0
    %1024 = vmatpush1.bf16.msra.mxu0 0
    %1025 = vmatprep.mubr.bf16.mxu0 0
    %1026 = vmatmul.mubr.bf16.gmra.mrb[0].mxu0 %v928
    %v1027 = vpop.f32.mrb[0].mxu0
    %v1028 = vadd.f32 0.0, %v1027
    %v1029 = vpop.f32.mrb[0].mxu0
    %v1030 = vpop.f32.mrb[0].mxu0
    %v1031 = vpop.f32.mrb[0].mxu0
    %1032 = vdwg.mxu0
    %v1033 = vrot.slane %v1028, 4
    %v1034 = vadd.f32 %v1028, %v1033
    %v1035 = vrot.slane %v1034, 2
    %v1036 = vadd.f32 %v1034, %v1035
    %v1037 = vrot.slane %v1036, 1
    %v1038 = vadd.f32 %v1036, %v1037
    %v1039 = vmul.f32 %v1038, %v714
    %v1040 = vsub.f32 %v1028, %v1039
    %v1041 = vmul.f32 %v1040, %v1040
    %v1042 = vrot.slane %v1041, 4
    %v1043 = vadd.f32 %v1041, %v1042
    %v1044 = vrot.slane %v1043, 2
    %v1045 = vadd.f32 %v1043, %v1044
    %v1046 = vrot.slane %v1045, 1
    %v1047 = vadd.f32 %v1045, %v1046
    %v1048 = vmul.f32 %v1047, %v714
    %v1049 = vld [vmem:[%s37] sm:$0x1]
    %v1050 = vadd.f32 %v1048, 1e-05
    %v1051 = vrsqrt.pop %v1050
    %v1052 = vmul.f32 %v1049, %v1051
    %v1053 = vld [vmem:[%s39] sm:$0x1]
    %v1054 = vmul.f32 %v1039, %v1052
    %v1055 = vsub.f32 %v1053, %v1054
    %v1057 = vlaneseq
    %v1058 = vshrl.u32 %v1057, 7
    %v1059 = vsub.s32 0, %v1058
    %v1060 = vrot.slane %v1052, %v1059
    %v1062 = vmul.f32 %v1028, %v1060
    %v1064 = vlaneseq
    %v1065 = vshrl.u32 %v1064, 7
    %v1066 = vsub.s32 0, %v1065
    %v1067 = vrot.slane %v1055, %v1066
    %v1069 = vadd.f32 %v1062, %v1067
    %v1070 = vmax.f32 %v1069, 0.0
    %v1071 = vpack.c.bf16 %v927, %v927
    %v1072 = vld [vmem:[#allocation17] sm:$0xf]
    %v1073 = vld [vmem:[#allocation17 + $0x4] sm:$0xf]
    %v1074 = vld [vmem:[#allocation17 + $0x8] sm:$0xf]
    %v1075 = vld [vmem:[#allocation17 + $0xc] sm:$0xf]
    %v1076 = vld [vmem:[#allocation17 + $0x10] sm:$0xf]
    %v1077 = vld [vmem:[#allocation17 + $0x14] sm:$0xf]
    %v1078 = vld [vmem:[#allocation17 + $0x18] sm:$0xf]
    %v1079 = vld [vmem:[#allocation17 + $0x1c] sm:$0xf]
    %v1080 = vld [vmem:[#allocation17 + $0x20] sm:$0xf]
    %v1081 = vld [vmem:[#allocation17 + $0x24] sm:$0xf]
    %v1082 = vld [vmem:[#allocation17 + $0x28] sm:$0xf]
    %v1083 = vld [vmem:[#allocation17 + $0x2c] sm:$0xf]
    %v1084 = vld [vmem:[#allocation17 + $0x30] sm:$0xf]
    %v1085 = vld [vmem:[#allocation17 + $0x34] sm:$0xf]
    %v1086 = vld [vmem:[#allocation17 + $0x38] sm:$0xf]
    %v1087 = vld [vmem:[#allocation17 + $0x3c] sm:$0xf]
    %v1104 = vunpack.c.l.b16 %v1072
    %v1105 = vunpack.c.l.b16 %v1073
    %v1106 = vunpack.c.l.b16 %v1074
    %v1107 = vunpack.c.l.b16 %v1075
    %v1108 = vunpack.c.l.b16 %v1076
    %v1109 = vunpack.c.l.b16 %v1077
    %v1110 = vunpack.c.l.b16 %v1078
    %v1111 = vunpack.c.l.b16 %v1079
    %v1112 = vunpack.c.l.b16 %v1080
    %v1113 = vunpack.c.l.b16 %v1081
    %v1114 = vunpack.c.l.b16 %v1082
    %v1115 = vunpack.c.l.b16 %v1083
    %v1116 = vunpack.c.l.b16 %v1084
    %v1117 = vunpack.c.l.b16 %v1085
    %v1118 = vunpack.c.l.b16 %v1086
    %v1119 = vunpack.c.l.b16 %v1087
    %v1120 = vpack.c.b16 %v1105, %v1104
    %v1121 = vpack.c.b16 %v1107, %v1106
    %v1122 = vpack.c.b16 %v1109, %v1108
    %v1123 = vpack.c.b16 %v1111, %v1110
    %v1124 = vpack.c.b16 %v1113, %v1112
    %v1125 = vpack.c.b16 %v1115, %v1114
    %v1126 = vpack.c.b16 %v1117, %v1116
    %v1127 = vpack.c.b16 %v1119, %v1118
    %1136 = vmatprep.subr.bf16.mxu0 0
    %1137 = vmatpush1.bf16.msra.mxu0 %v1120
    %1138 = vmatprep.subr.bf16.mxu0 0
    %1139 = vmatpush1.bf16.msra.mxu0 %v1121
    %1140 = vmatprep.subr.bf16.mxu0 0
    %1141 = vmatpush1.bf16.msra.mxu0 %v1122
    %1142 = vmatprep.subr.bf16.mxu0 0
    %1143 = vmatpush1.bf16.msra.mxu0 %v1123
    %1144 = vmatprep.subr.bf16.mxu0 0
    %1145 = vmatpush1.bf16.msra.mxu0 %v1124
    %1146 = vmatprep.subr.bf16.mxu0 0
    %1147 = vmatpush1.bf16.msra.mxu0 %v1125
    %1148 = vmatprep.subr.bf16.mxu0 0
    %1149 = vmatpush1.bf16.msra.mxu0 %v1126
    %1150 = vmatprep.subr.bf16.mxu0 0
    %1151 = vmatpush1.bf16.msra.mxu0 %v1127
    %1152 = vmatprep.subr.bf16.mxu0 0
    %1153 = vmatpush1.bf16.msra.mxu0 0
    %1154 = vmatprep.subr.bf16.mxu0 0
    %1155 = vmatpush1.bf16.msra.mxu0 0
    %1156 = vmatprep.subr.bf16.mxu0 0
    %1157 = vmatpush1.bf16.msra.mxu0 0
    %1158 = vmatprep.subr.bf16.mxu0 0
    %1159 = vmatpush1.bf16.msra.mxu0 0
    %1160 = vmatprep.subr.bf16.mxu0 0
    %1161 = vmatpush1.bf16.msra.mxu0 0
    %1162 = vmatprep.subr.bf16.mxu0 0
    %1163 = vmatpush1.bf16.msra.mxu0 0
    %1164 = vmatprep.subr.bf16.mxu0 0
    %1165 = vmatpush1.bf16.msra.mxu0 0
    %1166 = vmatprep.subr.bf16.mxu0 0
    %1167 = vmatpush1.bf16.msra.mxu0 0
    %1168 = vmatprep.mubr.bf16.mxu0 0
    %1169 = vmatmul.mubr.bf16.gmra.mrb[0].mxu0 %v1071
    %v1170 = vpop.f32.mrb[0].mxu0
    %v1171 = vadd.f32 0.0, %v1170
    %v1172 = vpop.f32.mrb[0].mxu0
    %v1173 = vpop.f32.mrb[0].mxu0
    %v1174 = vpop.f32.mrb[0].mxu0
    %1175 = vdwg.mxu0
    %v1176 = vrot.slane %v1171, 4
    %v1177 = vadd.f32 %v1171, %v1176
    %v1178 = vrot.slane %v1177, 2
    %v1179 = vadd.f32 %v1177, %v1178
    %v1180 = vrot.slane %v1179, 1
    %v1181 = vadd.f32 %v1179, %v1180
    %v1182 = vmul.f32 %v1181, %v714
    %v1183 = vsub.f32 %v1171, %v1182
    %v1184 = vmul.f32 %v1183, %v1183
    %v1185 = vrot.slane %v1184, 4
    %v1186 = vadd.f32 %v1184, %v1185
    %v1187 = vrot.slane %v1186, 2
    %v1188 = vadd.f32 %v1186, %v1187
    %v1189 = vrot.slane %v1188, 1
    %v1190 = vadd.f32 %v1188, %v1189
    %v1191 = vmul.f32 %v1190, %v714
    %v1192 = vld [vmem:[#allocation19] sm:$0x1]
    %v1193 = vadd.f32 %v1191, 1e-05
    %v1194 = vrsqrt.pop %v1193
    %v1195 = vmul.f32 %v1192, %v1194
    %v1196 = vld [vmem:[#allocation20] sm:$0x1]
    %v1197 = vmul.f32 %v1182, %v1195
    %v1198 = vsub.f32 %v1196, %v1197
    %v1200 = vlaneseq
    %v1201 = vshrl.u32 %v1200, 7
    %v1202 = vsub.s32 0, %v1201
    %v1203 = vrot.slane %v1195, %v1202
    %v1205 = vmul.f32 %v1171, %v1203
    %v1207 = vlaneseq
    %v1208 = vshrl.u32 %v1207, 7
    %v1209 = vsub.s32 0, %v1208
    %v1210 = vrot.slane %v1198, %v1209
    %v1212 = vadd.f32 %v1205, %v1210
    %v1213 = vmax.f32 %v1212, 0.0
    %v1214 = vpack.c.bf16 %v1213, %v1213
    %v1215 = vld [vmem:[#allocation22] sm:$0xf]
    %v1216 = vld [vmem:[#allocation22 + $0x4] sm:$0xf]
    %v1217 = vld [vmem:[#allocation22 + $0x8] sm:$0xf]
    %v1218 = vld [vmem:[#allocation22 + $0xc] sm:$0xf]
    %v1219 = vld [vmem:[#allocation22 + $0x10] sm:$0xf]
    %v1220 = vld [vmem:[#allocation22 + $0x14] sm:$0xf]
    %v1221 = vld [vmem:[#allocation22 + $0x18] sm:$0xf]
    %v1222 = vld [vmem:[#allocation22 + $0x1c] sm:$0xf]
    %v1223 = vld [vmem:[#allocation22 + $0x20] sm:$0xf]
    %v1224 = vld [vmem:[#allocation22 + $0x24] sm:$0xf]
    %v1225 = vld [vmem:[#allocation22 + $0x28] sm:$0xf]
    %v1226 = vld [vmem:[#allocation22 + $0x2c] sm:$0xf]
    %v1227 = vld [vmem:[#allocation22 + $0x30] sm:$0xf]
    %v1228 = vld [vmem:[#allocation22 + $0x34] sm:$0xf]
    %v1229 = vld [vmem:[#allocation22 + $0x38] sm:$0xf]
    %v1230 = vld [vmem:[#allocation22 + $0x3c] sm:$0xf]
    %v1247 = vunpack.c.l.b16 %v1215
    %v1248 = vunpack.c.l.b16 %v1216
    %v1249 = vunpack.c.l.b16 %v1217
    %v1250 = vunpack.c.l.b16 %v1218
    %v1251 = vunpack.c.l.b16 %v1219
    %v1252 = vunpack.c.l.b16 %v1220
    %v1253 = vunpack.c.l.b16 %v1221
    %v1254 = vunpack.c.l.b16 %v1222
    %v1255 = vunpack.c.l.b16 %v1223
    %v1256 = vunpack.c.l.b16 %v1224
    %v1257 = vunpack.c.l.b16 %v1225
    %v1258 = vunpack.c.l.b16 %v1226
    %v1259 = vunpack.c.l.b16 %v1227
    %v1260 = vunpack.c.l.b16 %v1228
    %v1261 = vunpack.c.l.b16 %v1229
    %v1262 = vunpack.c.l.b16 %v1230
    %v1263 = vpack.c.b16 %v1248, %v1247
    %v1264 = vpack.c.b16 %v1250, %v1249
    %v1265 = vpack.c.b16 %v1252, %v1251
    %v1266 = vpack.c.b16 %v1254, %v1253
    %v1267 = vpack.c.b16 %v1256, %v1255
    %v1268 = vpack.c.b16 %v1258, %v1257
    %v1269 = vpack.c.b16 %v1260, %v1259
    %v1270 = vpack.c.b16 %v1262, %v1261
    %1279 = vmatprep.subr.bf16.mxu0 0
    %1280 = vmatpush1.bf16.msra.mxu0 %v1263
    %1281 = vmatprep.subr.bf16.mxu0 0
    %1282 = vmatpush1.bf16.msra.mxu0 %v1264
    %1283 = vmatprep.subr.bf16.mxu0 0
    %1284 = vmatpush1.bf16.msra.mxu0 %v1265
    %1285 = vmatprep.subr.bf16.mxu0 0
    %1286 = vmatpush1.bf16.msra.mxu0 %v1266
    %1287 = vmatprep.subr.bf16.mxu0 0
    %1288 = vmatpush1.bf16.msra.mxu0 %v1267
    %1289 = vmatprep.subr.bf16.mxu0 0
    %1290 = vmatpush1.bf16.msra.mxu0 %v1268
    %1291 = vmatprep.subr.bf16.mxu0 0
    %1292 = vmatpush1.bf16.msra.mxu0 %v1269
    %1293 = vmatprep.subr.bf16.mxu0 0
    %1294 = vmatpush1.bf16.msra.mxu0 %v1270
    %1295 = vmatprep.subr.bf16.mxu0 0
    %1296 = vmatpush1.bf16.msra.mxu0 0
    %1297 = vmatprep.subr.bf16.mxu0 0
    %1298 = vmatpush1.bf16.msra.mxu0 0
    %1299 = vmatprep.subr.bf16.mxu0 0
    %1300 = vmatpush1.bf16.msra.mxu0 0
    %1301 = vmatprep.subr.bf16.mxu0 0
    %1302 = vmatpush1.bf16.msra.mxu0 0
    %1303 = vmatprep.subr.bf16.mxu0 0
    %1304 = vmatpush1.bf16.msra.mxu0 0
    %1305 = vmatprep.subr.bf16.mxu0 0
    %1306 = vmatpush1.bf16.msra.mxu0 0
    %1307 = vmatprep.subr.bf16.mxu0 0
    %1308 = vmatpush1.bf16.msra.mxu0 0
    %1309 = vmatprep.subr.bf16.mxu0 0
    %1310 = vmatpush1.bf16.msra.mxu0 0
    %1311 = vmatprep.mubr.bf16.mxu0 0
    %1312 = vmatmul.mubr.bf16.gmra.mrb[0].mxu0 %v1214
    %v1313 = vpop.f32.mrb[0].mxu0
    %v1314 = vadd.f32 0.0, %v1313
    %v1315 = vpop.f32.mrb[0].mxu0
    %v1316 = vpop.f32.mrb[0].mxu0
    %v1317 = vpop.f32.mrb[0].mxu0
    %1318 = vdwg.mxu0
    %v1319 = vrot.slane %v1314, 4
    %v1320 = vadd.f32 %v1314, %v1319
    %v1321 = vrot.slane %v1320, 2
    %v1322 = vadd.f32 %v1320, %v1321
    %v1323 = vrot.slane %v1322, 1
    %v1324 = vadd.f32 %v1322, %v1323
    %v1325 = vmul.f32 %v1324, %v714
    %v1326 = vsub.f32 %v1314, %v1325
    %v1327 = vmul.f32 %v1326, %v1326
    %v1328 = vrot.slane %v1327, 4
    %v1329 = vadd.f32 %v1327, %v1328
    %v1330 = vrot.slane %v1329, 2
    %v1331 = vadd.f32 %v1329, %v1330
    %v1332 = vrot.slane %v1331, 1
    %v1333 = vadd.f32 %v1331, %v1332
    %v1334 = vmul.f32 %v1333, %v714
    %v1335 = vld [vmem:[#allocation23] sm:$0x1]
    %v1336 = vadd.f32 %v1334, 1e-05
    %v1337 = vrsqrt.pop %v1336
    %v1338 = vmul.f32 %v1335, %v1337
    %v1339 = vld [vmem:[#allocation25] sm:$0x1]
    %v1340 = vmul.f32 %v1325, %v1338
    %v1341 = vsub.f32 %v1339, %v1340
    %v1343 = vlaneseq
    %v1344 = vshrl.u32 %v1343, 7
    %v1345 = vsub.s32 0, %v1344
    %v1346 = vrot.slane %v1338, %v1345
    %v1348 = vmul.f32 %v1314, %v1346
    %v1350 = vlaneseq
    %v1351 = vshrl.u32 %v1350, 7
    %v1352 = vsub.s32 0, %v1351
    %v1353 = vrot.slane %v1341, %v1352
    %v1355 = vadd.f32 %v1348, %v1353
    %v1356 = vmax.f32 %v1355, 0.0
    %v1357 = vadd.f32 %v1356, %v1070
    %v1358 = vpack.c.bf16 %v1357, %v1357
    %v1359 = vld [vmem:[#allocation29] sm:$0xf]
    %v1360 = vld [vmem:[#allocation29 + $0x4] sm:$0xf]
    %v1361 = vld [vmem:[#allocation29 + $0x8] sm:$0xf]
    %v1362 = vld [vmem:[#allocation29 + $0xc] sm:$0xf]
    %v1363 = vld [vmem:[#allocation29 + $0x10] sm:$0xf]
    %v1364 = vld [vmem:[#allocation29 + $0x14] sm:$0xf]
    %v1365 = vld [vmem:[#allocation29 + $0x18] sm:$0xf]
    %v1366 = vld [vmem:[#allocation29 + $0x1c] sm:$0xf]
    %v1367 = vld [vmem:[#allocation29 + $0x20] sm:$0xf]
    %v1368 = vld [vmem:[#allocation29 + $0x24] sm:$0xf]
    %v1369 = vld [vmem:[#allocation29 + $0x28] sm:$0xf]
    %v1370 = vld [vmem:[#allocation29 + $0x2c] sm:$0xf]
    %v1371 = vld [vmem:[#allocation29 + $0x30] sm:$0xf]
    %v1372 = vld [vmem:[#allocation29 + $0x34] sm:$0xf]
    %v1373 = vld [vmem:[#allocation29 + $0x38] sm:$0xf]
    %v1374 = vld [vmem:[#allocation29 + $0x3c] sm:$0xf]
    %v1375 = vld [vmem:[%s43] sm:$0x1]
    %v1377 = vlaneseq
    %v1378 = vshrl.u32 %v1377, 7
    %v1379 = vsub.s32 0, %v1378
    %v1380 = vrot.slane %v1375, %v1379
    %v1398 = vunpack.c.l.b16 %v1359
    %v1399 = vunpack.c.l.b16 %v1360
    %v1400 = vunpack.c.l.b16 %v1361
    %v1401 = vunpack.c.l.b16 %v1362
    %v1402 = vunpack.c.l.b16 %v1363
    %v1403 = vunpack.c.l.b16 %v1364
    %v1404 = vunpack.c.l.b16 %v1365
    %v1405 = vunpack.c.l.b16 %v1366
    %v1406 = vunpack.c.l.b16 %v1367
    %v1407 = vunpack.c.l.b16 %v1368
    %v1408 = vunpack.c.l.b16 %v1369
    %v1409 = vunpack.c.l.b16 %v1370
    %v1410 = vunpack.c.l.b16 %v1371
    %v1411 = vunpack.c.l.b16 %v1372
    %v1412 = vunpack.c.l.b16 %v1373
    %v1413 = vunpack.c.l.b16 %v1374
    %v1414 = vpack.c.b16 %v1399, %v1398
    %v1415 = vpack.c.b16 %v1401, %v1400
    %v1416 = vpack.c.b16 %v1403, %v1402
    %v1417 = vpack.c.b16 %v1405, %v1404
    %v1418 = vpack.c.b16 %v1407, %v1406
    %v1419 = vpack.c.b16 %v1409, %v1408
    %v1420 = vpack.c.b16 %v1411, %v1410
    %v1421 = vpack.c.b16 %v1413, %v1412
    %1430 = vmatprep.subr.bf16.mxu0 0
    %1431 = vmatpush1.bf16.msra.mxu0 %v1414
    %1432 = vmatprep.subr.bf16.mxu0 0
    %1433 = vmatpush1.bf16.msra.mxu0 %v1415
    %1434 = vmatprep.subr.bf16.mxu0 0
    %1435 = vmatpush1.bf16.msra.mxu0 %v1416
    %1436 = vmatprep.subr.bf16.mxu0 0
    %1437 = vmatpush1.bf16.msra.mxu0 %v1417
    %1438 = vmatprep.subr.bf16.mxu0 0
    %1439 = vmatpush1.bf16.msra.mxu0 %v1418
    %1440 = vmatprep.subr.bf16.mxu0 0
    %1441 = vmatpush1.bf16.msra.mxu0 %v1419
    %1442 = vmatprep.subr.bf16.mxu0 0
    %1443 = vmatpush1.bf16.msra.mxu0 %v1420
    %1444 = vmatprep.subr.bf16.mxu0 0
    %1445 = vmatpush1.bf16.msra.mxu0 %v1421
    %1446 = vmatprep.subr.bf16.mxu0 0
    %1447 = vmatpush1.bf16.msra.mxu0 0
    %1448 = vmatprep.subr.bf16.mxu0 0
    %1449 = vmatpush1.bf16.msra.mxu0 0
    %1450 = vmatprep.subr.bf16.mxu0 0
    %1451 = vmatpush1.bf16.msra.mxu0 0
    %1452 = vmatprep.subr.bf16.mxu0 0
    %1453 = vmatpush1.bf16.msra.mxu0 0
    %1454 = vmatprep.subr.bf16.mxu0 0
    %1455 = vmatpush1.bf16.msra.mxu0 0
    %1456 = vmatprep.subr.bf16.mxu0 0
    %1457 = vmatpush1.bf16.msra.mxu0 0
    %1458 = vmatprep.subr.bf16.mxu0 0
    %1459 = vmatpush1.bf16.msra.mxu0 0
    %1460 = vmatprep.subr.bf16.mxu0 0
    %1461 = vmatpush1.bf16.msra.mxu0 0
    %1462 = vmatprep.mubr.bf16.mxu0 0
    %1463 = vmatmul.mubr.bf16.gmra.mrb[0].mxu0 %v1358
    %v1464 = vpop.f32.mrb[0].mxu0
    %v1465 = vadd.f32 %v1380, %v1464
    %v1466 = vpop.f32.mrb[0].mxu0
    %v1467 = vpop.f32.mrb[0].mxu0
    %v1468 = vpop.f32.mrb[0].mxu0
    %1469 = vdwg.mxu0
    %v1470 = vpack.c.bf16 %v1070, %v1070
    %v1471 = vld [vmem:[#allocation31] sm:$0xf]
    %v1472 = vld [vmem:[#allocation31 + $0x4] sm:$0xf]
    %v1473 = vld [vmem:[#allocation31 + $0x8] sm:$0xf]
    %v1474 = vld [vmem:[#allocation31 + $0xc] sm:$0xf]
    %v1475 = vld [vmem:[#allocation31 + $0x10] sm:$0xf]
    %v1476 = vld [vmem:[#allocation31 + $0x14] sm:$0xf]
    %v1477 = vld [vmem:[#allocation31 + $0x18] sm:$0xf]
    %v1478 = vld [vmem:[#allocation31 + $0x1c] sm:$0xf]
    %v1479 = vld [vmem:[#allocation31 + $0x20] sm:$0xf]
    %v1480 = vld [vmem:[#allocation31 + $0x24] sm:$0xf]
    %v1481 = vld [vmem:[#allocation31 + $0x28] sm:$0xf]
    %v1482 = vld [vmem:[#allocation31 + $0x2c] sm:$0xf]
    %v1483 = vld [vmem:[#allocation31 + $0x30] sm:$0xf]
    %v1484 = vld [vmem:[#allocation31 + $0x34] sm:$0xf]
    %v1485 = vld [vmem:[#allocation31 + $0x38] sm:$0xf]
    %v1486 = vld [vmem:[#allocation31 + $0x3c] sm:$0xf]
    %v1487 = vld [vmem:[%s47] sm:$0x1]
    %v1489 = vlaneseq
    %v1490 = vshrl.u32 %v1489, 7
    %v1491 = vsub.s32 0, %v1490
    %v1492 = vrot.slane %v1487, %v1491
    %v1510 = vunpack.c.l.b16 %v1471
    %v1511 = vunpack.c.l.b16 %v1472
    %v1512 = vunpack.c.l.b16 %v1473
    %v1513 = vunpack.c.l.b16 %v1474
    %v1514 = vunpack.c.l.b16 %v1475
    %v1515 = vunpack.c.l.b16 %v1476
    %v1516 = vunpack.c.l.b16 %v1477
    %v1517 = vunpack.c.l.b16 %v1478
    %v1518 = vunpack.c.l.b16 %v1479
    %v1519 = vunpack.c.l.b16 %v1480
    %v1520 = vunpack.c.l.b16 %v1481
    %v1521 = vunpack.c.l.b16 %v1482
    %v1522 = vunpack.c.l.b16 %v1483
    %v1523 = vunpack.c.l.b16 %v1484
    %v1524 = vunpack.c.l.b16 %v1485
    %v1525 = vunpack.c.l.b16 %v1486
    %v1526 = vpack.c.b16 %v1511, %v1510
    %v1527 = vpack.c.b16 %v1513, %v1512
    %v1528 = vpack.c.b16 %v1515, %v1514
    %v1529 = vpack.c.b16 %v1517, %v1516
    %v1530 = vpack.c.b16 %v1519, %v1518
    %v1531 = vpack.c.b16 %v1521, %v1520
    %v1532 = vpack.c.b16 %v1523, %v1522
    %v1533 = vpack.c.b16 %v1525, %v1524
    %1542 = vmatprep.subr.bf16.mxu0 0
    %1543 = vmatpush1.bf16.msra.mxu0 %v1526
    %1544 = vmatprep.subr.bf16.mxu0 0
    %1545 = vmatpush1.bf16.msra.mxu0 %v1527
    %1546 = vmatprep.subr.bf16.mxu0 0
    %1547 = vmatpush1.bf16.msra.mxu0 %v1528
    %1548 = vmatprep.subr.bf16.mxu0 0
    %1549 = vmatpush1.bf16.msra.mxu0 %v1529
    %1550 = vmatprep.subr.bf16.mxu0 0
    %1551 = vmatpush1.bf16.msra.mxu0 %v1530
    %1552 = vmatprep.subr.bf16.mxu0 0
    %1553 = vmatpush1.bf16.msra.mxu0 %v1531
    %1554 = vmatprep.subr.bf16.mxu0 0
    %1555 = vmatpush1.bf16.msra.mxu0 %v1532
    %1556 = vmatprep.subr.bf16.mxu0 0
    %1557 = vmatpush1.bf16.msra.mxu0 %v1533
    %1558 = vmatprep.subr.bf16.mxu0 0
    %1559 = vmatpush1.bf16.msra.mxu0 0
    %1560 = vmatprep.subr.bf16.mxu0 0
    %1561 = vmatpush1.bf16.msra.mxu0 0
    %1562 = vmatprep.subr.bf16.mxu0 0
    %1563 = vmatpush1.bf16.msra.mxu0 0
    %1564 = vmatprep.subr.bf16.mxu0 0
    %1565 = vmatpush1.bf16.msra.mxu0 0
    %1566 = vmatprep.subr.bf16.mxu0 0
    %1567 = vmatpush1.bf16.msra.mxu0 0
    %1568 = vmatprep.subr.bf16.mxu0 0
    %1569 = vmatpush1.bf16.msra.mxu0 0
    %1570 = vmatprep.subr.bf16.mxu0 0
    %1571 = vmatpush1.bf16.msra.mxu0 0
    %1572 = vmatprep.subr.bf16.mxu0 0
    %1573 = vmatpush1.bf16.msra.mxu0 0
    %1574 = vmatprep.mubr.bf16.mxu0 0
    %1575 = vmatmul.mubr.bf16.gmra.mrb[0].mxu0 %v1470
    %v1576 = vpop.f32.mrb[0].mxu0
    %v1577 = vadd.f32 %v1492, %v1576
    %v1578 = vpop.f32.mrb[0].mxu0
    %v1579 = vpop.f32.mrb[0].mxu0
    %v1580 = vpop.f32.mrb[0].mxu0
    %1581 = vdwg.mxu0
    %v1582 = vlaneseq
    %v1583 = vand.u32 %v1582, 127
    %vm1584 = vcmp.lt.s32.totalorder %v1583, 8
    %1585 = vst [vmem:[#allocation32] sm:$0xff] %v1465
    %1586 = vst [vmem:[#allocation33] sm:$0xff] %v1577
    %v1587 = vsel %vm1584, %v1465, -1e+30
    %1588 = vmax.xlane.f32.xlu0 %v1587
    %v1589 = vpop.xlane.xlu0 %1588
    %v1590 = vsub.f32 %v1587, %v1589
    %v1591 = vmul.f32 %v1590, 1.442695
    %v1592 = vpow.pop %v1591
    %v1593 = vsel %vm1584, %v1592, 0.0
    %1594 = vadd.xlane.f32.xlu0 %v1593
    %v1595 = vpop.xlane.xlu0 %1594
    %v1596 = vrcp.pop %v1595
    %v1597 = vmul.f32 %v1593, %v1596
    %1598 = vst [vmem:[#allocation35] sm:$0xff] %v1597
    %v1599 = vsel %vm1584, %v1577, -1e+30
    %1600 = vmax.xlane.f32.xlu0 %v1599
    %v1601 = vpop.xlane.xlu0 %1600
    %v1602 = vsub.f32 %v1599, %v1601
    %v1603 = vmul.f32 %v1602, 1.442695
    %v1604 = vpow.pop %v1603
    %v1605 = vsel %vm1584, %v1604, 0.0
    %1606 = vadd.xlane.f32.xlu0 %v1605
    %v1607 = vpop.xlane.xlu0 %1606
    %v1608 = vrcp.pop %v1607
    %v1609 = vmul.f32 %v1605, %v1608
    %1610 = vst [vmem:[#allocation36] sm:$0xff] %v1609
    %1611 = vst [vmem:[#allocation38] sm:$0xff] %v746
    %1612 = vst [vmem:[#allocation39] sm:$0xff] %v927
    %1613 = vst [vmem:[#allocation41] sm:$0xff] %v784
    %1614 = vst [vmem:[#allocation42] sm:$0xff] %v1070
    // Predicated region
    $region174: #{tpu_custom_call.1} parent=1 // pred_check
      _
    $region175: #{tpu_custom_call.1} parent=1 // pred_check_branch
      %1616 = sbr.rel (0) target = $region177
    $region176: #{tpu_custom_call.1} parent=1 // pred_region
      %s1618 = ssub.s32 128, 128
      %1619 = vsyncadd [#allocation4], %s1618
      %s1621 = sshll.u32 [#allocation32], 4
      %s1622 = int_to_ptr.vmem [resolvable:$true] %s1621
      %1624 = dma.vmem_to_hbm [thread:$0]  %s1622, 128, %s49, [#allocation4]
    $region177: #{tpu_custom_call.1} parent=1 // pred_fallthru
      _
    // Predicated region
    $region178: #{tpu_custom_call.1} parent=1 // pred_check
      _
    $region179: #{tpu_custom_call.1} parent=1 // pred_check_branch
      %1626 = sbr.rel (0) target = $region181
    $region180: #{tpu_custom_call.1} parent=1 // pred_region
      %s1628 = ssub.s32 128, 128
      %1629 = vsyncadd [#allocation34], %s1628
      %s1631 = sshll.u32 [#allocation33], 4
      %s1632 = int_to_ptr.vmem [resolvable:$true] %s1631
      %1634 = dma.vmem_to_hbm [thread:$0]  %s1632, 128, %s51, [#allocation34]
    $region181: #{tpu_custom_call.1} parent=1 // pred_fallthru
      _
    // Predicated region
    $region182: #{tpu_custom_call.1} parent=1 // pred_check
      _
    $region183: #{tpu_custom_call.1} parent=1 // pred_check_branch
      %1636 = sbr.rel (0) target = $region185
    $region184: #{tpu_custom_call.1} parent=1 // pred_region
      %s1638 = ssub.s32 128, 128
      %1639 = vsyncadd [#allocation34], %s1638
      %s1641 = sshll.u32 [#allocation35], 4
      %s1642 = int_to_ptr.vmem [resolvable:$true] %s1641
      %1644 = dma.vmem_to_hbm [thread:$0]  %s1642, 128, %s53, [#allocation34]
    $region185: #{tpu_custom_call.1} parent=1 // pred_fallthru
      _
    // Predicated region
    $region186: #{tpu_custom_call.1} parent=1 // pred_check
      _
    $region187: #{tpu_custom_call.1} parent=1 // pred_check_branch
      %1646 = sbr.rel (0) target = $region189
    $region188: #{tpu_custom_call.1} parent=1 // pred_region
      %s1648 = ssub.s32 128, 128
      %1649 = vsyncadd [#allocation37], %s1648
      %s1651 = sshll.u32 [#allocation36], 4
      %s1652 = int_to_ptr.vmem [resolvable:$true] %s1651
      %1654 = dma.vmem_to_hbm [thread:$0]  %s1652, 128, %s55, [#allocation37]
    $region189: #{tpu_custom_call.1} parent=1 // pred_fallthru
      _
    // Predicated region
    $region190: #{tpu_custom_call.1} parent=1 // pred_check
      _
    $region191: #{tpu_custom_call.1} parent=1 // pred_check_branch
      %1656 = sbr.rel (0) target = $region193
    $region192: #{tpu_custom_call.1} parent=1 // pred_region
      %s1658 = ssub.s32 128, 128
      %1659 = vsyncadd [#allocation37], %s1658
      %s1661 = sshll.u32 [#allocation38], 4
      %s1662 = int_to_ptr.vmem [resolvable:$true] %s1661
      %1664 = dma.vmem_to_hbm [thread:$0]  %s1662, 128, %s57, [#allocation37]
    $region193: #{tpu_custom_call.1} parent=1 // pred_fallthru
      _
    // Predicated region
    $region194: #{tpu_custom_call.1} parent=1 // pred_check
      _
    $region195: #{tpu_custom_call.1} parent=1 // pred_check_branch
      %1666 = sbr.rel (0) target = $region197
    $region196: #{tpu_custom_call.1} parent=1 // pred_region
      %s1668 = ssub.s32 128, 128
      %1669 = vsyncadd [#allocation40], %s1668
      %s1671 = sshll.u32 [#allocation39], 4
      %s1672 = int_to_ptr.vmem [resolvable:$true] %s1671
      %1674 = dma.vmem_to_hbm [thread:$0]  %s1672, 128, %s59, [#allocation40]
    $region197: #{tpu_custom_call.1} parent=1 // pred_fallthru
      _
    // Predicated region
    $region198: #{tpu_custom_call.1} parent=1 // pred_check
      _
    $region199: #{tpu_custom_call.1} parent=1 // pred_check_branch
      %1676 = sbr.rel (0) target = $region201
    $region200: #{tpu_custom_call.1} parent=1 // pred_region
      %s1678 = ssub.s32 128, 128
      %1679 = vsyncadd [#allocation40], %s1678
      %s1681 = sshll.u32 [#allocation41], 4
      %s1682 = int_to_ptr.vmem [resolvable:$true] %s1681
      %1684 = dma.vmem_to_hbm [thread:$0]  %s1682, 128, %s61, [#allocation40]
    $region201: #{tpu_custom_call.1} parent=1 // pred_fallthru
      _
    // Predicated region
    $region202: #{tpu_custom_call.1} parent=1 // pred_check
      _
    $region203: #{tpu_custom_call.1} parent=1 // pred_check_branch
      %1686 = sbr.rel (0) target = $region205
    $region204: #{tpu_custom_call.1} parent=1 // pred_region
      %s1688 = ssub.s32 128, 128
      %1689 = vsyncadd [#allocation43], %s1688
      %s1691 = sshll.u32 [#allocation42], 4
      %s1692 = int_to_ptr.vmem [resolvable:$true] %s1691
      %1694 = dma.vmem_to_hbm [thread:$0]  %s1692, 128, %s63, [#allocation43]
    $region205: #{tpu_custom_call.1} parent=1 // pred_fallthru
      _
    // Predicated region
    $region206: #{tpu_custom_call.1} parent=1 // pred_check
      _
    $region207: #{tpu_custom_call.1} parent=1 // pred_check_branch
      %1696 = sbr.rel (0) target = $region209
    $region208: #{tpu_custom_call.1} parent=1 // pred_region
      %1697 = dma.done [#allocation4], 128
    $region209: #{tpu_custom_call.1} parent=1 // pred_fallthru
      _
    // Predicated region
    $region210: #{tpu_custom_call.1} parent=1 // pred_check
      _
    $region211: #{tpu_custom_call.1} parent=1 // pred_check_branch
      %1699 = sbr.rel (0) target = $region213
    $region212: #{tpu_custom_call.1} parent=1 // pred_region
      %1700 = dma.done [#allocation34], 128
    $region213: #{tpu_custom_call.1} parent=1 // pred_fallthru
      _
    // Predicated region
    $region214: #{tpu_custom_call.1} parent=1 // pred_check
      _
    $region215: #{tpu_custom_call.1} parent=1 // pred_check_branch
      %1702 = sbr.rel (0) target = $region217
    $region216: #{tpu_custom_call.1} parent=1 // pred_region
      %1703 = dma.done [#allocation34], 128
    $region217: #{tpu_custom_call.1} parent=1 // pred_fallthru
      _
    // Predicated region
    $region218: #{tpu_custom_call.1} parent=1 // pred_check
      _
    $region219: #{tpu_custom_call.1} parent=1 // pred_check_branch
      %1705 = sbr.rel (0) target = $region221
    $region220: #{tpu_custom_call.1} parent=1 // pred_region
      %1706 = dma.done [#allocation37], 128
    $region221: #{tpu_custom_call.1} parent=1 // pred_fallthru
      _
    // Predicated region
    $region222: #{tpu_custom_call.1} parent=1 // pred_check
      _
    $region223: #{tpu_custom_call.1} parent=1 // pred_check_branch
      %1708 = sbr.rel (0) target = $region225
    $region224: #{tpu_custom_call.1} parent=1 // pred_region
      %1709 = dma.done [#allocation37], 128
    $region225: #{tpu_custom_call.1} parent=1 // pred_fallthru
      _
    // Predicated region
    $region226: #{tpu_custom_call.1} parent=1 // pred_check
      _
    $region227: #{tpu_custom_call.1} parent=1 // pred_check_branch
      %1711 = sbr.rel (0) target = $region229
    $region228: #{tpu_custom_call.1} parent=1 // pred_region
      %1712 = dma.done [#allocation40], 128
    $region229: #{tpu_custom_call.1} parent=1 // pred_fallthru
      _
    // Predicated region
    $region230: #{tpu_custom_call.1} parent=1 // pred_check
      _
    $region231: #{tpu_custom_call.1} parent=1 // pred_check_branch
      %1714 = sbr.rel (0) target = $region233
    $region232: #{tpu_custom_call.1} parent=1 // pred_region
      %1715 = dma.done [#allocation40], 128
    $region233: #{tpu_custom_call.1} parent=1 // pred_fallthru
      _
    // Predicated region
    $region234: #{tpu_custom_call.1} parent=1 // pred_check
      _
    $region235: #{tpu_custom_call.1} parent=1 // pred_check_branch
      %1717 = sbr.rel (0) target = $region237
    $region236: #{tpu_custom_call.1} parent=1 // pred_region
      %1718 = dma.done [#allocation43], 128
    $region237: #{tpu_custom_call.1} parent=1 // pred_fallthru
      _
    %1719 = vsyncpa [#allocation3], 1
    %1720 = vsyncpa [#allocation6], 1
    %1721 = vsyncpa [#allocation9], 1
    %1722 = vsyncpa [#allocation12], 1
    %1723 = vsyncpa [#allocation15], 1
    %1724 = vsyncpa [#allocation18], 1
    %1725 = vsyncpa [#allocation21], 1
    %1726 = vsyncpa [#allocation24], 1
    %1727 = vsyncpa [#allocation27], 1
    %1728 = vsyncpa [#allocation30], 1
    %1729 = vsyncpa [#allocation4], 1
    %1730 = vsyncpa [#allocation34], 1
    %1731 = vsyncpa [#allocation37], 1
    %1732 = vsyncpa [#allocation40], 1
    %1733 = vsyncpa [#allocation43], 1

</llo_original>
